<compile_context>
chip_gen: v7x
topology: tpu7x:2x2x1
jax: 0.10.0
libtpu: 0.0.40
codegen_flags: <defaults>
</compile_context>

<pallas_src>
import functools

import jax
import jax.numpy as jnp
from jax.experimental import pallas as pl
from jax.experimental.pallas import tpu as pltpu


# ---------------------------------------------------------------------------
# Synthetic backbone construction (deterministic parameters)
# ---------------------------------------------------------------------------
def _conv_child(key, cin, cout):
    kw, kb = jax.random.split(key)
    w = 0.1 * jax.random.normal(kw, (cin, cout), jnp.float32)
    b = 0.1 * jax.random.normal(kb, (1, cout), jnp.float32)
    return {"type": "conv", "w": w, "b": b}


def _bn_child(key, c):
    kg, kb, km, kv = jax.random.split(key, 4)
    gamma = 1.0 + 0.1 * jax.random.normal(kg, (1, c), jnp.float32)
    beta = 0.1 * jax.random.normal(kb, (1, c), jnp.float32)
    mean = 0.1 * jax.random.normal(km, (1, c), jnp.float32)
    var = 1.0 + jnp.abs(jax.random.normal(kv, (1, c), jnp.float32))
    eps = 1e-5
    scale = gamma / jnp.sqrt(var + eps)     # eval-mode BatchNorm as affine
    shift = beta - mean * scale
    return {"type": "bn", "scale": scale, "shift": shift}


def make_backbone(key, in_dims, hidden, num_classes):
    """8 children, mirroring a ResNet-style backbone used inside DeepLab."""
    ks = jax.random.split(key, 6)
    return [
        _conv_child(ks[0], in_dims, hidden),      # 0: conv1
        _bn_child(ks[1], hidden),                 # 1: bn1
        {"type": "relu"},                         # 2: relu
        _conv_child(ks[2], hidden, hidden),       # 3
        {"type": "relu"},                         # 4
        _conv_child(ks[3], hidden, hidden),       # 5
        {"type": "relu"},                         # 6
        _conv_child(ks[4], hidden, num_classes),  # 7: final (out_layer)
    ]


def apply_child_ref(child, x2d):
    """Pure-JAX reference for one raw (unfused) child."""
    t = child["type"]
    if t == "conv":
        return x2d @ child["w"] + child["b"]
    if t == "bn":
        return x2d * child["scale"] + child["shift"]
    return jnp.maximum(x2d, 0.0)


# ---------------------------------------------------------------------------
# Fused-op compilation: fold BN into the previous conv, fuse ReLU.
# ---------------------------------------------------------------------------
def compile_ops(children):
    """Compile raw children into a list of fused ops.

    Each op: {"kind": "linear"|"affine"|"relu", "relu": bool, "params": [...]}.
      linear: params = [w (Cin,Cout), b (1,Cout)]
      affine: params = [scale (1,C), shift (1,C)]
      relu  : params = []
    """
    ops = []
    for ch in children:
        t = ch["type"]
        if t == "conv":
            ops.append({"kind": "linear", "relu": False,
                        "params": [ch["w"], ch["b"]]})
        elif t == "bn":
            if ops and ops[-1]["kind"] == "linear" and not ops[-1]["relu"]:
                w, b = ops[-1]["params"]
                ops[-1]["params"] = [w * ch["scale"],
                                     b * ch["scale"] + ch["shift"]]
            else:
                ops.append({"kind": "affine", "relu": False,
                            "params": [ch["scale"], ch["shift"]]})
        elif t == "relu":
            if ops and ops[-1]["kind"] in ("linear", "affine") \
                    and not ops[-1]["relu"]:
                ops[-1]["relu"] = True
            else:
                ops.append({"kind": "relu", "relu": True, "params": []})
        else:
            raise ValueError(t)
    return ops


def ops_out_channels(ops, cin):
    c = cin
    for op in ops:
        if op["kind"] == "linear":
            c = op["params"][0].shape[1]
    return c


# ---------------------------------------------------------------------------
# The single fused Pallas kernel
# ---------------------------------------------------------------------------
def _apply_ops(x, meta, params, idx):
    """Apply a static list of fused ops; params consumed starting at idx."""
    for kind, relu in meta:
        if kind == "linear":
            w = params[idx][...]
            b = params[idx + 1][...]
            idx += 2
            x = jnp.dot(x, w, preferred_element_type=jnp.float32) + b
        elif kind == "affine":
            scale = params[idx][...]
            shift = params[idx + 1][...]
            idx += 2
            x = x * scale + shift
        if relu:
            x = jnp.maximum(x, 0.0)
    return x, idx


def _fused_kernel(x1_ref, x2_ref, *refs,
                  h1_meta, h2_meta, aux_meta, out_meta):
    aux_ref, out_ref = refs[-2], refs[-1]
    params = refs[:-2]
    a = x1_ref[...]
    b = x2_ref[...]
    a, idx = _apply_ops(a, h1_meta, params, 0)     # head 1
    b, idx = _apply_ops(b, h2_meta, params, idx)   # head 2
    y = a + b                                      # Add()
    y, idx = _apply_ops(y, aux_meta, params, idx)  # aux_layer (empty if cut==7)
    aux_ref[...] = y.astype(aux_ref.dtype)
    z, idx = _apply_ops(y, out_meta, params, idx)  # out_layer
    out_ref[...] = z.astype(out_ref.dtype)


# ---------------------------------------------------------------------------
# DeeplabDoublePartialBackbone (JAX / Pallas)
# ---------------------------------------------------------------------------
class DeeplabDoublePartialBackbonePallas:
    def __init__(self, backbone1, backbone2, in_dims1, in_dims2, cut_idx):
        assert 0 < cut_idx <= 7
        self.cut_idx = cut_idx
        self.in_dims1 = in_dims1
        self.in_dims2 = in_dims2
        self.backbone1 = backbone1
        self.backbone2 = backbone2

        # Fused (BN-folded, ReLU-fused) op lists per segment.
        self.h1_ops = compile_ops(backbone1[:cut_idx])
        self.h2_ops = compile_ops(backbone2[:cut_idx])
        self.aux_ops = compile_ops(backbone1[cut_idx:-1]) if cut_idx < 7 else []
        self.out_ops = compile_ops(backbone1[-1:])

        # Flat parameter list + static metadata for the kernel closure.
        self.params = []
        metas = []
        for ops in (self.h1_ops, self.h2_ops, self.aux_ops, self.out_ops):
            meta = []
            for op in ops:
                meta.append((op["kind"], op["relu"]))
                self.params.extend(op["params"])
            metas.append(tuple(meta))
        (self.h1_meta, self.h2_meta,
         self.aux_meta, self.out_meta) = metas

        head_c1 = ops_out_channels(self.h1_ops, in_dims1)
        head_c2 = ops_out_channels(self.h2_ops, in_dims2)
        assert head_c1 == head_c2
        self.c_aux = ops_out_channels(self.aux_ops, head_c1)
        self.c_out = ops_out_channels(self.out_ops, self.c_aux)

    @staticmethod
    def _pick_tm(m):
        # Prefer >= 2 grid steps (keeps both v7x TensorCores busy) while
        # keeping the row tile a multiple of 8 for clean sublane layout.
        for tm in (256, 128, 64, 32, 16, 8):
            if m % tm == 0 and m // tm >= 2:
                return tm
        return m  # single full-extent block (always legal)

    def forward(self, x_nchw):
        n, c, h, w = x_nchw.shape
        assert c == self.in_dims1 + self.in_dims2
        m = n * h * w
        # Single NCHW -> NHWC -> (M, C) layout change; channel split at 2-D level.
        x2d = jnp.transpose(x_nchw, (0, 2, 3, 1)).reshape(m, c)
        x1 = x2d[:, : self.in_dims1]
        x2 = x2d[:, self.in_dims1:]

        tm = self._pick_tm(m)
        grid = (m // tm,) if m % tm == 0 else (1,)

        kernel = functools.partial(
            _fused_kernel,
            h1_meta=self.h1_meta, h2_meta=self.h2_meta,
            aux_meta=self.aux_meta, out_meta=self.out_meta)

        in_specs = [
            pl.BlockSpec((tm, self.in_dims1), lambda i: (i, 0)),
            pl.BlockSpec((tm, self.in_dims2), lambda i: (i, 0)),
        ]
        for p in self.params:
            # Full-array (tiny) parameter blocks, resident for every grid step.
            in_specs.append(pl.BlockSpec(p.shape, lambda i: (0, 0)))

        out_shape = (
            jax.ShapeDtypeStruct((m, self.c_aux), jnp.float32),
            jax.ShapeDtypeStruct((m, self.c_out), jnp.float32),
        )
        out_specs = (
            pl.BlockSpec((tm, self.c_aux), lambda i: (i, 0)),
            pl.BlockSpec((tm, self.c_out), lambda i: (i, 0)),
        )

        aux2d, out2d = pl.pallas_call(
            kernel,
            out_shape=out_shape,
            grid=grid,
            in_specs=in_specs,
            out_specs=out_specs,
            compiler_params=pltpu.CompilerParams(
                dimension_semantics=("parallel",)),
        )(x1, x2, *self.params)

        def unflat(y2d):
            return jnp.transpose(
                y2d.reshape(n, h, w, y2d.shape[1]), (0, 3, 1, 2))

        return {"aux": unflat(aux2d), "out": unflat(out2d)}

    # Pure-JAX reference on the RAW (unfused, un-folded) children.
    def forward_reference(self, x_nchw):
        n, c, h, w = x_nchw.shape
        x2d = jnp.transpose(x_nchw, (0, 2, 3, 1)).reshape(n * h * w, c)
        a = x2d[:, : self.in_dims1]
        b = x2d[:, self.in_dims1:]
        for ch in self.backbone1[: self.cut_idx]:
            a = apply_child_ref(ch, a)
        for ch in self.backbone2[: self.cut_idx]:
            b = apply_child_ref(ch, b)
        y = a + b
        if self.cut_idx < 7:
            for ch in self.backbone1[self.cut_idx:-1]:
                y = apply_child_ref(ch, y)
        aux = y
        out = y
        for ch in self.backbone1[-1:]:
            out = apply_child_ref(ch, out)

        def unflat(y2d):
            return jnp.transpose(
                y2d.reshape(n, h, w, y2d.shape[1]), (0, 3, 1, 2))

        return {"aux": unflat(aux), "out": unflat(out)}


# ---------------------------------------------------------------------------
if __name__ == "__main__":
    key = jax.random.PRNGKey(0)
    k_bb1, k_bb2, k_x = jax.random.split(key, 3)

    in_dims1, in_dims2 = 4, 4
    hidden, num_classes = 32, 8
    batch, spatial = 2, 16
    cut_idx = 4

    backbone1 = make_backbone(k_bb1, in_dims1, hidden, num_classes)
    backbone2 = make_backbone(k_bb2, in_dims2, hidden, num_classes)
    model = DeeplabDoublePartialBackbonePallas(
        backbone1, backbone2, in_dims1, in_dims2, cut_idx)

    # Input in PyTorch NCHW convention.
    x = jax.random.normal(
        k_x, (batch, in_dims1 + in_dims2, spatial, spatial), jnp.float32)

    out = model.forward(x)
    jax.block_until_ready(out["out"])
    jax.block_until_ready(out["aux"])

    ref = model.forward_reference(x)
    assert out["aux"].shape == (batch, hidden, spatial, spatial)
    assert out["out"].shape == (batch, num_classes, spatial, spatial)
    assert jnp.allclose(out["aux"], ref["aux"], atol=1e-4, rtol=1e-3)
    assert jnp.allclose(out["out"], ref["out"], atol=1e-4, rtol=1e-3)

    print("KERNEL_OK")
</pallas_src>

<mosaic_0001>
module attributes {stable_mosaic.version = 11 : i64} {
  func.func @_fused_kernel(%arg0: i32, %arg1: memref<256x4xf32, #tpu.memory_space<vmem>>, %arg2: memref<256x4xf32, #tpu.memory_space<vmem>>, %arg3: memref<4x32xf32, #tpu.memory_space<vmem>>, %arg4: memref<1x32xf32, #tpu.memory_space<vmem>>, %arg5: memref<32x32xf32, #tpu.memory_space<vmem>>, %arg6: memref<1x32xf32, #tpu.memory_space<vmem>>, %arg7: memref<4x32xf32, #tpu.memory_space<vmem>>, %arg8: memref<1x32xf32, #tpu.memory_space<vmem>>, %arg9: memref<32x32xf32, #tpu.memory_space<vmem>>, %arg10: memref<1x32xf32, #tpu.memory_space<vmem>>, %arg11: memref<32x32xf32, #tpu.memory_space<vmem>>, %arg12: memref<1x32xf32, #tpu.memory_space<vmem>>, %arg13: memref<32x8xf32, #tpu.memory_space<vmem>>, %arg14: memref<1x8xf32, #tpu.memory_space<vmem>>, %arg15: memref<256x32xf32, #tpu.memory_space<vmem>>, %arg16: memref<256x8xf32, #tpu.memory_space<vmem>>) attributes {dimension_semantics = [#tpu.dimension_semantics<parallel>], iteration_bounds = array<i64: 2>, scalar_prefetch = 0 : i64, scratch_operands = 0 : i64, tpu.core_type = #tpu.core_type<tc>, window_params = [{transform_indices = @transform_0, window_bounds = array<i64: 256, 4>}, {transform_indices = @transform_1, window_bounds = array<i64: 256, 4>}, {pipeline_mode = #tpu.pipeline_mode<synchronous>, transform_indices = @transform_2, window_bounds = array<i64: 4, 32>}, {pipeline_mode = #tpu.pipeline_mode<synchronous>, transform_indices = @transform_3, window_bounds = array<i64: 1, 32>}, {pipeline_mode = #tpu.pipeline_mode<synchronous>, transform_indices = @transform_4, window_bounds = array<i64: 32, 32>}, {pipeline_mode = #tpu.pipeline_mode<synchronous>, transform_indices = @transform_5, window_bounds = array<i64: 1, 32>}, {pipeline_mode = #tpu.pipeline_mode<synchronous>, transform_indices = @transform_6, window_bounds = array<i64: 4, 32>}, {pipeline_mode = #tpu.pipeline_mode<synchronous>, transform_indices = @transform_7, window_bounds = array<i64: 1, 32>}, {pipeline_mode = #tpu.pipeline_mode<synchronous>, transform_indices = @transform_8, window_bounds = array<i64: 32, 32>}, {pipeline_mode = #tpu.pipeline_mode<synchronous>, transform_indices = @transform_9, window_bounds = array<i64: 1, 32>}, {pipeline_mode = #tpu.pipeline_mode<synchronous>, transform_indices = @transform_10, window_bounds = array<i64: 32, 32>}, {pipeline_mode = #tpu.pipeline_mode<synchronous>, transform_indices = @transform_11, window_bounds = array<i64: 1, 32>}, {pipeline_mode = #tpu.pipeline_mode<synchronous>, transform_indices = @transform_12, window_bounds = array<i64: 32, 8>}, {pipeline_mode = #tpu.pipeline_mode<synchronous>, transform_indices = @transform_13, window_bounds = array<i64: 1, 8>}, {transform_indices = @transform_14, window_bounds = array<i64: 256, 32>}, {transform_indices = @transform_15, window_bounds = array<i64: 256, 8>}]} {
    %c0 = arith.constant 0 : index
    %c0_0 = arith.constant 0 : index
    %0 = vector.load %arg1[%c0, %c0_0] : memref<256x4xf32, #tpu.memory_space<vmem>>, vector<256x4xf32>
    %c0_1 = arith.constant 0 : index
    %c0_2 = arith.constant 0 : index
    %1 = vector.load %arg2[%c0_1, %c0_2] : memref<256x4xf32, #tpu.memory_space<vmem>>, vector<256x4xf32>
    %c0_3 = arith.constant 0 : index
    %c0_4 = arith.constant 0 : index
    %2 = vector.load %arg3[%c0_3, %c0_4] : memref<4x32xf32, #tpu.memory_space<vmem>>, vector<4x32xf32>
    %c0_5 = arith.constant 0 : index
    %c0_6 = arith.constant 0 : index
    %3 = vector.load %arg4[%c0_5, %c0_6] : memref<1x32xf32, #tpu.memory_space<vmem>>, vector<1x32xf32>
    %cst = arith.constant dense<0.000000e+00> : vector<256x32xf32>
    %4 = tpu.matmul %0, %2, %cst {dimension_numbers = #tpu.dot_dimension_numbers<[1], [0], [0], [1], [0, 0, 1, 1], [], []>} : vector<256x4xf32>, vector<4x32xf32>, vector<256x32xf32> -> vector<256x32xf32>
    %5 = vector.broadcast %3 : vector<1x32xf32> to vector<256x32xf32>
    %6 = arith.addf %4, %5 : vector<256x32xf32>
    %cst_7 = arith.constant 0.000000e+00 : f32
    %7 = vector.broadcast %cst_7 : f32 to vector<256x32xf32>
    %8 = arith.maximumf %6, %7 : vector<256x32xf32>
    %c0_8 = arith.constant 0 : index
    %c0_9 = arith.constant 0 : index
    %9 = vector.load %arg5[%c0_8, %c0_9] : memref<32x32xf32, #tpu.memory_space<vmem>>, vector<32x32xf32>
    %c0_10 = arith.constant 0 : index
    %c0_11 = arith.constant 0 : index
    %10 = vector.load %arg6[%c0_10, %c0_11] : memref<1x32xf32, #tpu.memory_space<vmem>>, vector<1x32xf32>
    %cst_12 = arith.constant dense<0.000000e+00> : vector<256x32xf32>
    %11 = tpu.matmul %8, %9, %cst_12 {dimension_numbers = #tpu.dot_dimension_numbers<[1], [0], [0], [1], [0, 0, 1, 1], [], []>} : vector<256x32xf32>, vector<32x32xf32>, vector<256x32xf32> -> vector<256x32xf32>
    %12 = vector.broadcast %10 : vector<1x32xf32> to vector<256x32xf32>
    %13 = arith.addf %11, %12 : vector<256x32xf32>
    %c0_13 = arith.constant 0 : index
    %c0_14 = arith.constant 0 : index
    %14 = vector.load %arg7[%c0_13, %c0_14] : memref<4x32xf32, #tpu.memory_space<vmem>>, vector<4x32xf32>
    %c0_15 = arith.constant 0 : index
    %c0_16 = arith.constant 0 : index
    %15 = vector.load %arg8[%c0_15, %c0_16] : memref<1x32xf32, #tpu.memory_space<vmem>>, vector<1x32xf32>
    %cst_17 = arith.constant dense<0.000000e+00> : vector<256x32xf32>
    %16 = tpu.matmul %1, %14, %cst_17 {dimension_numbers = #tpu.dot_dimension_numbers<[1], [0], [0], [1], [0, 0, 1, 1], [], []>} : vector<256x4xf32>, vector<4x32xf32>, vector<256x32xf32> -> vector<256x32xf32>
    %17 = vector.broadcast %15 : vector<1x32xf32> to vector<256x32xf32>
    %18 = arith.addf %16, %17 : vector<256x32xf32>
    %cst_18 = arith.constant 0.000000e+00 : f32
    %19 = vector.broadcast %cst_18 : f32 to vector<256x32xf32>
    %20 = arith.maximumf %18, %19 : vector<256x32xf32>
    %c0_19 = arith.constant 0 : index
    %c0_20 = arith.constant 0 : index
    %21 = vector.load %arg9[%c0_19, %c0_20] : memref<32x32xf32, #tpu.memory_space<vmem>>, vector<32x32xf32>
    %c0_21 = arith.constant 0 : index
    %c0_22 = arith.constant 0 : index
    %22 = vector.load %arg10[%c0_21, %c0_22] : memref<1x32xf32, #tpu.memory_space<vmem>>, vector<1x32xf32>
    %cst_23 = arith.constant dense<0.000000e+00> : vector<256x32xf32>
    %23 = tpu.matmul %20, %21, %cst_23 {dimension_numbers = #tpu.dot_dimension_numbers<[1], [0], [0], [1], [0, 0, 1, 1], [], []>} : vector<256x32xf32>, vector<32x32xf32>, vector<256x32xf32> -> vector<256x32xf32>
    %24 = vector.broadcast %22 : vector<1x32xf32> to vector<256x32xf32>
    %25 = arith.addf %23, %24 : vector<256x32xf32>
    %26 = arith.addf %13, %25 : vector<256x32xf32>
    %cst_24 = arith.constant 0.000000e+00 : f32
    %27 = vector.broadcast %cst_24 : f32 to vector<256x32xf32>
    %28 = arith.maximumf %26, %27 : vector<256x32xf32>
    %c0_25 = arith.constant 0 : index
    %c0_26 = arith.constant 0 : index
    %29 = vector.load %arg11[%c0_25, %c0_26] : memref<32x32xf32, #tpu.memory_space<vmem>>, vector<32x32xf32>
    %c0_27 = arith.constant 0 : index
    %c0_28 = arith.constant 0 : index
    %30 = vector.load %arg12[%c0_27, %c0_28] : memref<1x32xf32, #tpu.memory_space<vmem>>, vector<1x32xf32>
    %cst_29 = arith.constant dense<0.000000e+00> : vector<256x32xf32>
    %31 = tpu.matmul %28, %29, %cst_29 {dimension_numbers = #tpu.dot_dimension_numbers<[1], [0], [0], [1], [0, 0, 1, 1], [], []>} : vector<256x32xf32>, vector<32x32xf32>, vector<256x32xf32> -> vector<256x32xf32>
    %32 = vector.broadcast %30 : vector<1x32xf32> to vector<256x32xf32>
    %33 = arith.addf %31, %32 : vector<256x32xf32>
    %cst_30 = arith.constant 0.000000e+00 : f32
    %34 = vector.broadcast %cst_30 : f32 to vector<256x32xf32>
    %35 = arith.maximumf %33, %34 : vector<256x32xf32>
    %c0_31 = arith.constant 0 : index
    %c0_32 = arith.constant 0 : index
    %36 = vector.load %arg15[%c0_31, %c0_32] : memref<256x32xf32, #tpu.memory_space<vmem>>, vector<256x32xf32>
    tpu.vector_store %arg15[%c0_31, %c0_32], %35 {strides = array<i32>} : memref<256x32xf32, #tpu.memory_space<vmem>>, vector<256x32xf32>,
    %c0_33 = arith.constant 0 : index
    %c0_34 = arith.constant 0 : index
    %37 = vector.load %arg13[%c0_33, %c0_34] : memref<32x8xf32, #tpu.memory_space<vmem>>, vector<32x8xf32>
    %c0_35 = arith.constant 0 : index
    %c0_36 = arith.constant 0 : index
    %38 = vector.load %arg14[%c0_35, %c0_36] : memref<1x8xf32, #tpu.memory_space<vmem>>, vector<1x8xf32>
    %cst_37 = arith.constant dense<0.000000e+00> : vector<256x8xf32>
    %39 = tpu.matmul %35, %37, %cst_37 {dimension_numbers = #tpu.dot_dimension_numbers<[1], [0], [0], [1], [0, 0, 1, 1], [], []>} : vector<256x32xf32>, vector<32x8xf32>, vector<256x8xf32> -> vector<256x8xf32>
    %40 = vector.broadcast %38 : vector<1x8xf32> to vector<256x8xf32>
    %41 = arith.addf %39, %40 : vector<256x8xf32>
    %c0_38 = arith.constant 0 : index
    %c0_39 = arith.constant 0 : index
    %42 = vector.load %arg16[%c0_38, %c0_39] : memref<256x8xf32, #tpu.memory_space<vmem>>, vector<256x8xf32>
    tpu.vector_store %arg16[%c0_38, %c0_39], %41 {strides = array<i32>} : memref<256x8xf32, #tpu.memory_space<vmem>>, vector<256x8xf32>,
    return
  }
  func.func @transform_0(%arg0: i32) -> (i32, i32) {
    %c0_i32 = arith.constant 0 : i32
    %c0_i32_0 = arith.constant 0 : i32
    return %arg0, %c0_i32 : i32, i32
  }
  func.func @transform_1(%arg0: i32) -> (i32, i32) {
    %c0_i32 = arith.constant 0 : i32
    %c0_i32_0 = arith.constant 0 : i32
    return %arg0, %c0_i32 : i32, i32
  }
  func.func @transform_2(%arg0: i32) -> (i32, i32) {
    %c0_i32 = arith.constant 0 : i32
    %c0_i32_0 = arith.constant 0 : i32
    %c0_i32_1 = arith.constant 0 : i32
    return %c0_i32, %c0_i32_0 : i32, i32
  }
  func.func @transform_3(%arg0: i32) -> (i32, i32) {
    %c0_i32 = arith.constant 0 : i32
    %c0_i32_0 = arith.constant 0 : i32
    %c0_i32_1 = arith.constant 0 : i32
    return %c0_i32, %c0_i32_0 : i32, i32
  }
  func.func @transform_4(%arg0: i32) -> (i32, i32) {
    %c0_i32 = arith.constant 0 : i32
    %c0_i32_0 = arith.constant 0 : i32
    %c0_i32_1 = arith.constant 0 : i32
    return %c0_i32, %c0_i32_0 : i32, i32
  }
  func.func @transform_5(%arg0: i32) -> (i32, i32) {
    %c0_i32 = arith.constant 0 : i32
    %c0_i32_0 = arith.constant 0 : i32
    %c0_i32_1 = arith.constant 0 : i32
    return %c0_i32, %c0_i32_0 : i32, i32
  }
  func.func @transform_6(%arg0: i32) -> (i32, i32) {
    %c0_i32 = arith.constant 0 : i32
    %c0_i32_0 = arith.constant 0 : i32
    %c0_i32_1 = arith.constant 0 : i32
    return %c0_i32, %c0_i32_0 : i32, i32
  }
  func.func @transform_7(%arg0: i32) -> (i32, i32) {
    %c0_i32 = arith.constant 0 : i32
    %c0_i32_0 = arith.constant 0 : i32
    %c0_i32_1 = arith.constant 0 : i32
    return %c0_i32, %c0_i32_0 : i32, i32
  }
  func.func @transform_8(%arg0: i32) -> (i32, i32) {
    %c0_i32 = arith.constant 0 : i32
    %c0_i32_0 = arith.constant 0 : i32
    %c0_i32_1 = arith.constant 0 : i32
    return %c0_i32, %c0_i32_0 : i32, i32
  }
  func.func @transform_9(%arg0: i32) -> (i32, i32) {
    %c0_i32 = arith.constant 0 : i32
    %c0_i32_0 = arith.constant 0 : i32
    %c0_i32_1 = arith.constant 0 : i32
    return %c0_i32, %c0_i32_0 : i32, i32
  }
  func.func @transform_10(%arg0: i32) -> (i32, i32) {
    %c0_i32 = arith.constant 0 : i32
    %c0_i32_0 = arith.constant 0 : i32
    %c0_i32_1 = arith.constant 0 : i32
    return %c0_i32, %c0_i32_0 : i32, i32
  }
  func.func @transform_11(%arg0: i32) -> (i32, i32) {
    %c0_i32 = arith.constant 0 : i32
    %c0_i32_0 = arith.constant 0 : i32
    %c0_i32_1 = arith.constant 0 : i32
    return %c0_i32, %c0_i32_0 : i32, i32
  }
  func.func @transform_12(%arg0: i32) -> (i32, i32) {
    %c0_i32 = arith.constant 0 : i32
    %c0_i32_0 = arith.constant 0 : i32
    %c0_i32_1 = arith.constant 0 : i32
    return %c0_i32, %c0_i32_0 : i32, i32
  }
  func.func @transform_13(%arg0: i32) -> (i32, i32) {
    %c0_i32 = arith.constant 0 : i32
    %c0_i32_0 = arith.constant 0 : i32
    %c0_i32_1 = arith.constant 0 : i32
    return %c0_i32, %c0_i32_0 : i32, i32
  }
  func.func @transform_14(%arg0: i32) -> (i32, i32) {
    %c0_i32 = arith.constant 0 : i32
    %c0_i32_0 = arith.constant 0 : i32
    return %arg0, %c0_i32 : i32, i32
  }
  func.func @transform_15(%arg0: i32) -> (i32, i32) {
    %c0_i32 = arith.constant 0 : i32
    %c0_i32_0 = arith.constant 0 : i32
    return %arg0, %c0_i32 : i32, i32
  }
}

</mosaic_0001>

<llo_original>
// kernel: tpu_custom_call.1
$region0: #{tpu_custom_call.1}
  #allocation0 [shape = 'u32[]', space=smem, size = 0x4, offset = 0x4, fixed_abs, tag = 'smem constant byte address 0x4 - core index']
  #allocation1 [shape = 'u32[144,128]{1,0:T(1,128)}', space=vmem, size = 0x12000, scoped, tag = 'internal scratch']
  %s0 = inlined_call_operand.vmem [shape: f32[512,4], index: 0, kind: input, shape index: {}]
  %s1 = inlined_call_operand.vmem [shape: f32[512,4], index: 1, kind: input, shape index: {}]
  %s2 = inlined_call_operand.vmem [shape: f32[4,32], index: 2, kind: input, shape index: {}]
  %s3 = inlined_call_operand.vmem [shape: f32[1,32], index: 3, kind: input, shape index: {}]
  %s4 = inlined_call_operand.vmem [shape: f32[32,32], index: 4, kind: input, shape index: {}]
  %s5 = inlined_call_operand.vmem [shape: f32[1,32], index: 5, kind: input, shape index: {}]
  %s6 = inlined_call_operand.vmem [shape: f32[4,32], index: 6, kind: input, shape index: {}]
  %s7 = inlined_call_operand.vmem [shape: f32[1,32], index: 7, kind: input, shape index: {}]
  %s8 = inlined_call_operand.vmem [shape: f32[32,32], index: 8, kind: input, shape index: {}]
  %s9 = inlined_call_operand.vmem [shape: f32[1,32], index: 9, kind: input, shape index: {}]
  %s10 = inlined_call_operand.vmem [shape: f32[32,32], index: 10, kind: input, shape index: {}]
  %s11 = inlined_call_operand.vmem [shape: f32[1,32], index: 11, kind: input, shape index: {}]
  %s12 = inlined_call_operand.vmem [shape: f32[32,8], index: 12, kind: input, shape index: {}]
  %s13 = inlined_call_operand.vmem [shape: f32[1,8], index: 13, kind: input, shape index: {}]
  %s14 = inlined_call_operand.vmem [shape: f32[512,32], index: 14, kind: output, shape index: {0}]
  %s15 = inlined_call_operand.vmem [shape: f32[512,8], index: 15, kind: output, shape index: {1}]
  %16 = xla_tuple %s14, %s15
  %s17 = sld [smem:[#allocation0]]
  $region97: #{tpu_custom_call.1} parent=0
    _
  %s19 = ssub.s32 1, %s17
  %s20 = scalar_select 0, %s19, %s17
  loop: start=0, step=1, limit=4
  $region2: #{tpu_custom_call.1} parent=0 // loop_pre_header
    _
  $region3: #{tpu_custom_call.1} parent=0 // loop_header
    %s22 = sphi 0, %s26
    %p23 = scmp.ge.s32.totalorder %s22, 4
    %s32 = sphi 0, %s34
    %s35 = sphi 0, %s32
    %s36 = sphi 0, %s35
    %s52 = sphi 0, %s36
    %s58 = sphi 0, %s60
    %s61 = sphi 0, %s58
    %s62 = sphi 0, %s61
    %s78 = sphi 0, %s62
    %s82 = sphi 0, %s82
    %s84 = sphi 0, %s82
    %s85 = sphi 0, %s84
    %s99 = sphi 0, %s85
    %s103 = sphi 0, %s103
    %s105 = sphi 0, %s103
    %s106 = sphi 0, %s105
    %s120 = sphi 0, %s106
    %s124 = sphi 0, %s124
    %s126 = sphi 0, %s124
    %s127 = sphi 0, %s126
    %s141 = sphi 0, %s127
    %s145 = sphi 0, %s145
    %s147 = sphi 0, %s145
    %s148 = sphi 0, %s147
    %s162 = sphi 0, %s148
    %s166 = sphi 0, %s166
    %s168 = sphi 0, %s166
    %s169 = sphi 0, %s168
    %s183 = sphi 0, %s169
    %s187 = sphi 0, %s187
    %s189 = sphi 0, %s187
    %s190 = sphi 0, %s189
    %s204 = sphi 0, %s190
    %s208 = sphi 0, %s208
    %s210 = sphi 0, %s208
    %s211 = sphi 0, %s210
    %s225 = sphi 0, %s211
    %s229 = sphi 0, %s229
    %s231 = sphi 0, %s229
    %s232 = sphi 0, %s231
    %s246 = sphi 0, %s232
    %s250 = sphi 0, %s250
    %s252 = sphi 0, %s250
    %s253 = sphi 0, %s252
    %s267 = sphi 0, %s253
    %s271 = sphi 0, %s271
    %s273 = sphi 0, %s271
    %s274 = sphi 0, %s273
    %s288 = sphi 0, %s274
    %s292 = sphi 0, %s292
    %s294 = sphi 0, %s292
    %s295 = sphi 0, %s294
    %s309 = sphi 0, %s295
    %s313 = sphi 0, %s313
    %s315 = sphi 0, %s313
    %s316 = sphi 0, %s315
    %s330 = sphi 0, %s316
    %s336 = sphi 0, %s338
    %s339 = sphi 0, %s336
    %s340 = sphi 0, %s339
    %s356 = sphi 0, %s340
    %s362 = sphi 0, %s364
    %s365 = sphi 0, %s362
    %s366 = sphi 0, %s365
    %s382 = sphi 0, %s366
  $region4: #{tpu_custom_call.1} parent=0 // loop_header_branch
    %25 = sbr.rel (%p23) target = $region8
  $region5: #{tpu_custom_call.1} parent=0 // loop_body
    %s27 = ssub.s32 %s22, 1
    %s28 = ssub.s32 %s22, 2
    %s29 = sadd.s32 %s22, 1
    %s30 = ssub.s32 %s22, %s29
    %p31 = scmp.eq.s32.totalorder %s30, 0
    %s33 = sadd.s32 %s32, 1
    %s34 = scalar_select %p31, %s32, %s33
    %p37 = pneg %p31
    %p38 = scmp.eq.s32.totalorder %s22, 1
    %p39 = por %p37, %p38
    %p40 = scmp.ne.s32.totalorder %s32, %s35
    %p41 = scmp.eq.s32.totalorder %s22, 0
    %p42 = por %p40, %p41
    %p43 = scmp.ne.s32.totalorder %s32, %s35
    %p44 = scmp.eq.s32.totalorder %s27, 1
    %p45 = por %p43, %p44
    %p46 = scmp.ne.s32.totalorder %s35, %s36
    %p47 = scmp.eq.s32.totalorder %s27, 0
    %p48 = por %p46, %p47
    %p49 = scmp.ne.s32.totalorder %s35, %s36
    %p50 = scmp.eq.s32.totalorder %s28, 1
    %p51 = por %p49, %p50
    %p53 = scmp.ne.s32.totalorder %s36, %s52
    %p54 = scmp.eq.s32.totalorder %s28, 0
    %p55 = por %p53, %p54
    %s56 = ssub.s32 %s22, %s29
    %p57 = scmp.eq.s32.totalorder %s56, 0
    %s59 = sadd.s32 %s58, 1
    %s60 = scalar_select %p57, %s58, %s59
    %p63 = pneg %p57
    %p64 = scmp.eq.s32.totalorder %s22, 1
    %p65 = por %p63, %p64
    %p66 = scmp.ne.s32.totalorder %s58, %s61
    %p67 = scmp.eq.s32.totalorder %s22, 0
    %p68 = por %p66, %p67
    %p69 = scmp.ne.s32.totalorder %s58, %s61
    %p70 = scmp.eq.s32.totalorder %s27, 1
    %p71 = por %p69, %p70
    %p72 = scmp.ne.s32.totalorder %s61, %s62
    %p73 = scmp.eq.s32.totalorder %s27, 0
    %p74 = por %p72, %p73
    %p75 = scmp.ne.s32.totalorder %s61, %s62
    %p76 = scmp.eq.s32.totalorder %s28, 1
    %p77 = por %p75, %p76
    %p79 = scmp.ne.s32.totalorder %s62, %s78
    %p80 = scmp.eq.s32.totalorder %s28, 0
    %p81 = por %p79, %p80
    %s83 = sadd.s32 %s82, 1
    %p86 = scmp.eq.s32.totalorder %s22, 1
    %p87 = scmp.ne.s32.totalorder %s82, %s84
    %p88 = scmp.eq.s32.totalorder %s22, 0
    %p89 = por %p87, %p88
    %p90 = scmp.ne.s32.totalorder %s82, %s84
    %p91 = scmp.eq.s32.totalorder %s27, 1
    %p92 = por %p90, %p91
    %p93 = scmp.ne.s32.totalorder %s84, %s85
    %p94 = scmp.eq.s32.totalorder %s27, 0
    %p95 = por %p93, %p94
    %p96 = scmp.ne.s32.totalorder %s84, %s85
    %p97 = scmp.eq.s32.totalorder %s28, 1
    %p98 = por %p96, %p97
    %p100 = scmp.ne.s32.totalorder %s85, %s99
    %p101 = scmp.eq.s32.totalorder %s28, 0
    %p102 = por %p100, %p101
    %s104 = sadd.s32 %s103, 1
    %p107 = scmp.eq.s32.totalorder %s22, 1
    %p108 = scmp.ne.s32.totalorder %s103, %s105
    %p109 = scmp.eq.s32.totalorder %s22, 0
    %p110 = por %p108, %p109
    %p111 = scmp.ne.s32.totalorder %s103, %s105
    %p112 = scmp.eq.s32.totalorder %s27, 1
    %p113 = por %p111, %p112
    %p114 = scmp.ne.s32.totalorder %s105, %s106
    %p115 = scmp.eq.s32.totalorder %s27, 0
    %p116 = por %p114, %p115
    %p117 = scmp.ne.s32.totalorder %s105, %s106
    %p118 = scmp.eq.s32.totalorder %s28, 1
    %p119 = por %p117, %p118
    %p121 = scmp.ne.s32.totalorder %s106, %s120
    %p122 = scmp.eq.s32.totalorder %s28, 0
    %p123 = por %p121, %p122
    %s125 = sadd.s32 %s124, 1
    %p128 = scmp.eq.s32.totalorder %s22, 1
    %p129 = scmp.ne.s32.totalorder %s124, %s126
    %p130 = scmp.eq.s32.totalorder %s22, 0
    %p131 = por %p129, %p130
    %p132 = scmp.ne.s32.totalorder %s124, %s126
    %p133 = scmp.eq.s32.totalorder %s27, 1
    %p134 = por %p132, %p133
    %p135 = scmp.ne.s32.totalorder %s126, %s127
    %p136 = scmp.eq.s32.totalorder %s27, 0
    %p137 = por %p135, %p136
    %p138 = scmp.ne.s32.totalorder %s126, %s127
    %p139 = scmp.eq.s32.totalorder %s28, 1
    %p140 = por %p138, %p139
    %p142 = scmp.ne.s32.totalorder %s127, %s141
    %p143 = scmp.eq.s32.totalorder %s28, 0
    %p144 = por %p142, %p143
    %s146 = sadd.s32 %s145, 1
    %p149 = scmp.eq.s32.totalorder %s22, 1
    %p150 = scmp.ne.s32.totalorder %s145, %s147
    %p151 = scmp.eq.s32.totalorder %s22, 0
    %p152 = por %p150, %p151
    %p153 = scmp.ne.s32.totalorder %s145, %s147
    %p154 = scmp.eq.s32.totalorder %s27, 1
    %p155 = por %p153, %p154
    %p156 = scmp.ne.s32.totalorder %s147, %s148
    %p157 = scmp.eq.s32.totalorder %s27, 0
    %p158 = por %p156, %p157
    %p159 = scmp.ne.s32.totalorder %s147, %s148
    %p160 = scmp.eq.s32.totalorder %s28, 1
    %p161 = por %p159, %p160
    %p163 = scmp.ne.s32.totalorder %s148, %s162
    %p164 = scmp.eq.s32.totalorder %s28, 0
    %p165 = por %p163, %p164
    %s167 = sadd.s32 %s166, 1
    %p170 = scmp.eq.s32.totalorder %s22, 1
    %p171 = scmp.ne.s32.totalorder %s166, %s168
    %p172 = scmp.eq.s32.totalorder %s22, 0
    %p173 = por %p171, %p172
    %p174 = scmp.ne.s32.totalorder %s166, %s168
    %p175 = scmp.eq.s32.totalorder %s27, 1
    %p176 = por %p174, %p175
    %p177 = scmp.ne.s32.totalorder %s168, %s169
    %p178 = scmp.eq.s32.totalorder %s27, 0
    %p179 = por %p177, %p178
    %p180 = scmp.ne.s32.totalorder %s168, %s169
    %p181 = scmp.eq.s32.totalorder %s28, 1
    %p182 = por %p180, %p181
    %p184 = scmp.ne.s32.totalorder %s169, %s183
    %p185 = scmp.eq.s32.totalorder %s28, 0
    %p186 = por %p184, %p185
    %s188 = sadd.s32 %s187, 1
    %p191 = scmp.eq.s32.totalorder %s22, 1
    %p192 = scmp.ne.s32.totalorder %s187, %s189
    %p193 = scmp.eq.s32.totalorder %s22, 0
    %p194 = por %p192, %p193
    %p195 = scmp.ne.s32.totalorder %s187, %s189
    %p196 = scmp.eq.s32.totalorder %s27, 1
    %p197 = por %p195, %p196
    %p198 = scmp.ne.s32.totalorder %s189, %s190
    %p199 = scmp.eq.s32.totalorder %s27, 0
    %p200 = por %p198, %p199
    %p201 = scmp.ne.s32.totalorder %s189, %s190
    %p202 = scmp.eq.s32.totalorder %s28, 1
    %p203 = por %p201, %p202
    %p205 = scmp.ne.s32.totalorder %s190, %s204
    %p206 = scmp.eq.s32.totalorder %s28, 0
    %p207 = por %p205, %p206
    %s209 = sadd.s32 %s208, 1
    %p212 = scmp.eq.s32.totalorder %s22, 1
    %p213 = scmp.ne.s32.totalorder %s208, %s210
    %p214 = scmp.eq.s32.totalorder %s22, 0
    %p215 = por %p213, %p214
    %p216 = scmp.ne.s32.totalorder %s208, %s210
    %p217 = scmp.eq.s32.totalorder %s27, 1
    %p218 = por %p216, %p217
    %p219 = scmp.ne.s32.totalorder %s210, %s211
    %p220 = scmp.eq.s32.totalorder %s27, 0
    %p221 = por %p219, %p220
    %p222 = scmp.ne.s32.totalorder %s210, %s211
    %p223 = scmp.eq.s32.totalorder %s28, 1
    %p224 = por %p222, %p223
    %p226 = scmp.ne.s32.totalorder %s211, %s225
    %p227 = scmp.eq.s32.totalorder %s28, 0
    %p228 = por %p226, %p227
    %s230 = sadd.s32 %s229, 1
    %p233 = scmp.eq.s32.totalorder %s22, 1
    %p234 = scmp.ne.s32.totalorder %s229, %s231
    %p235 = scmp.eq.s32.totalorder %s22, 0
    %p236 = por %p234, %p235
    %p237 = scmp.ne.s32.totalorder %s229, %s231
    %p238 = scmp.eq.s32.totalorder %s27, 1
    %p239 = por %p237, %p238
    %p240 = scmp.ne.s32.totalorder %s231, %s232
    %p241 = scmp.eq.s32.totalorder %s27, 0
    %p242 = por %p240, %p241
    %p243 = scmp.ne.s32.totalorder %s231, %s232
    %p244 = scmp.eq.s32.totalorder %s28, 1
    %p245 = por %p243, %p244
    %p247 = scmp.ne.s32.totalorder %s232, %s246
    %p248 = scmp.eq.s32.totalorder %s28, 0
    %p249 = por %p247, %p248
    %s251 = sadd.s32 %s250, 1
    %p254 = scmp.eq.s32.totalorder %s22, 1
    %p255 = scmp.ne.s32.totalorder %s250, %s252
    %p256 = scmp.eq.s32.totalorder %s22, 0
    %p257 = por %p255, %p256
    %p258 = scmp.ne.s32.totalorder %s250, %s252
    %p259 = scmp.eq.s32.totalorder %s27, 1
    %p260 = por %p258, %p259
    %p261 = scmp.ne.s32.totalorder %s252, %s253
    %p262 = scmp.eq.s32.totalorder %s27, 0
    %p263 = por %p261, %p262
    %p264 = scmp.ne.s32.totalorder %s252, %s253
    %p265 = scmp.eq.s32.totalorder %s28, 1
    %p266 = por %p264, %p265
    %p268 = scmp.ne.s32.totalorder %s253, %s267
    %p269 = scmp.eq.s32.totalorder %s28, 0
    %p270 = por %p268, %p269
    %s272 = sadd.s32 %s271, 1
    %p275 = scmp.eq.s32.totalorder %s22, 1
    %p276 = scmp.ne.s32.totalorder %s271, %s273
    %p277 = scmp.eq.s32.totalorder %s22, 0
    %p278 = por %p276, %p277
    %p279 = scmp.ne.s32.totalorder %s271, %s273
    %p280 = scmp.eq.s32.totalorder %s27, 1
    %p281 = por %p279, %p280
    %p282 = scmp.ne.s32.totalorder %s273, %s274
    %p283 = scmp.eq.s32.totalorder %s27, 0
    %p284 = por %p282, %p283
    %p285 = scmp.ne.s32.totalorder %s273, %s274
    %p286 = scmp.eq.s32.totalorder %s28, 1
    %p287 = por %p285, %p286
    %p289 = scmp.ne.s32.totalorder %s274, %s288
    %p290 = scmp.eq.s32.totalorder %s28, 0
    %p291 = por %p289, %p290
    %s293 = sadd.s32 %s292, 1
    %p296 = scmp.eq.s32.totalorder %s22, 1
    %p297 = scmp.ne.s32.totalorder %s292, %s294
    %p298 = scmp.eq.s32.totalorder %s22, 0
    %p299 = por %p297, %p298
    %p300 = scmp.ne.s32.totalorder %s292, %s294
    %p301 = scmp.eq.s32.totalorder %s27, 1
    %p302 = por %p300, %p301
    %p303 = scmp.ne.s32.totalorder %s294, %s295
    %p304 = scmp.eq.s32.totalorder %s27, 0
    %p305 = por %p303, %p304
    %p306 = scmp.ne.s32.totalorder %s294, %s295
    %p307 = scmp.eq.s32.totalorder %s28, 1
    %p308 = por %p306, %p307
    %p310 = scmp.ne.s32.totalorder %s295, %s309
    %p311 = scmp.eq.s32.totalorder %s28, 0
    %p312 = por %p310, %p311
    %s314 = sadd.s32 %s313, 1
    %p317 = scmp.eq.s32.totalorder %s22, 1
    %p318 = scmp.ne.s32.totalorder %s313, %s315
    %p319 = scmp.eq.s32.totalorder %s22, 0
    %p320 = por %p318, %p319
    %p321 = scmp.ne.s32.totalorder %s313, %s315
    %p322 = scmp.eq.s32.totalorder %s27, 1
    %p323 = por %p321, %p322
    %p324 = scmp.ne.s32.totalorder %s315, %s316
    %p325 = scmp.eq.s32.totalorder %s27, 0
    %p326 = por %p324, %p325
    %p327 = scmp.ne.s32.totalorder %s315, %s316
    %p328 = scmp.eq.s32.totalorder %s28, 1
    %p329 = por %p327, %p328
    %p331 = scmp.ne.s32.totalorder %s316, %s330
    %p332 = scmp.eq.s32.totalorder %s28, 0
    %p333 = por %p331, %p332
    %s334 = ssub.s32 %s22, %s29
    %p335 = scmp.eq.s32.totalorder %s334, 0
    %s337 = sadd.s32 %s336, 1
    %s338 = scalar_select %p335, %s336, %s337
    %p341 = pneg %p335
    %p342 = scmp.eq.s32.totalorder %s22, 1
    %p343 = por %p341, %p342
    %p344 = scmp.ne.s32.totalorder %s336, %s339
    %p345 = scmp.eq.s32.totalorder %s22, 0
    %p346 = por %p344, %p345
    %p347 = scmp.ne.s32.totalorder %s336, %s339
    %p348 = scmp.eq.s32.totalorder %s27, 1
    %p349 = por %p347, %p348
    %p350 = scmp.ne.s32.totalorder %s339, %s340
    %p351 = scmp.eq.s32.totalorder %s27, 0
    %p352 = por %p350, %p351
    %p353 = scmp.ne.s32.totalorder %s339, %s340
    %p354 = scmp.eq.s32.totalorder %s28, 1
    %p355 = por %p353, %p354
    %p357 = scmp.ne.s32.totalorder %s340, %s356
    %p358 = scmp.eq.s32.totalorder %s28, 0
    %p359 = por %p357, %p358
    %s360 = ssub.s32 %s22, %s29
    %p361 = scmp.eq.s32.totalorder %s360, 0
    %s363 = sadd.s32 %s362, 1
    %s364 = scalar_select %p361, %s362, %s363
    %p367 = pneg %p361
    %p368 = scmp.eq.s32.totalorder %s22, 1
    %p369 = por %p367, %p368
    %p370 = scmp.ne.s32.totalorder %s362, %s365
    %p371 = scmp.eq.s32.totalorder %s22, 0
    %p372 = por %p370, %p371
    %p373 = scmp.ne.s32.totalorder %s362, %s365
    %p374 = scmp.eq.s32.totalorder %s27, 1
    %p375 = por %p373, %p374
    %p376 = scmp.ne.s32.totalorder %s365, %s366
    %p377 = scmp.eq.s32.totalorder %s27, 0
    %p378 = por %p376, %p377
    %p379 = scmp.ne.s32.totalorder %s365, %s366
    %p380 = scmp.eq.s32.totalorder %s28, 1
    %p381 = por %p379, %p380
    %p383 = scmp.ne.s32.totalorder %s366, %s382
    %p384 = scmp.eq.s32.totalorder %s28, 0
    %p385 = por %p383, %p384
    %p386 = scmp.le.s32.totalorder 1, %s22
    %p387 = scmp.lt.s32.totalorder %s22, 3
    %p388 = pnand %p386, %p387
    %p389 = pneg %p388
    // Predicated region
    $region9: #{tpu_custom_call.1} parent=5 // pred_check
      _
    $region10: #{tpu_custom_call.1} parent=5 // pred_check_branch
      %391 = sbr.rel (%p388) target = $region12
    $region11: #{tpu_custom_call.1} parent=5 // pred_region
      %s392 = ssub.s32 %s22, 1
      // Predicated region
      $region13: #{tpu_custom_call.1} parent=11 // pred_check
        %p393 = pneg %p95
      $region14: #{tpu_custom_call.1} parent=11 // pred_check_branch
        %395 = sbr.rel (%p393) target = $region16
      $region15: #{tpu_custom_call.1} parent=11 // pred_region
        _
      $region16: #{tpu_custom_call.1} parent=11 // pred_fallthru
        _
      // Predicated region
      $region17: #{tpu_custom_call.1} parent=11 // pred_check
        %p396 = pneg %p116
      $region18: #{tpu_custom_call.1} parent=11 // pred_check_branch
        %398 = sbr.rel (%p396) target = $region20
      $region19: #{tpu_custom_call.1} parent=11 // pred_region
        _
      $region20: #{tpu_custom_call.1} parent=11 // pred_fallthru
        _
      // Predicated region
      $region21: #{tpu_custom_call.1} parent=11 // pred_check
        %p399 = pneg %p137
      $region22: #{tpu_custom_call.1} parent=11 // pred_check_branch
        %401 = sbr.rel (%p399) target = $region24
      $region23: #{tpu_custom_call.1} parent=11 // pred_region
        _
      $region24: #{tpu_custom_call.1} parent=11 // pred_fallthru
        _
      // Predicated region
      $region25: #{tpu_custom_call.1} parent=11 // pred_check
        %p402 = pneg %p158
      $region26: #{tpu_custom_call.1} parent=11 // pred_check_branch
        %404 = sbr.rel (%p402) target = $region28
      $region27: #{tpu_custom_call.1} parent=11 // pred_region
        _
      $region28: #{tpu_custom_call.1} parent=11 // pred_fallthru
        _
      // Predicated region
      $region29: #{tpu_custom_call.1} parent=11 // pred_check
        %p405 = pneg %p179
      $region30: #{tpu_custom_call.1} parent=11 // pred_check_branch
        %407 = sbr.rel (%p405) target = $region32
      $region31: #{tpu_custom_call.1} parent=11 // pred_region
        _
      $region32: #{tpu_custom_call.1} parent=11 // pred_fallthru
        _
      // Predicated region
      $region33: #{tpu_custom_call.1} parent=11 // pred_check
        %p408 = pneg %p200
      $region34: #{tpu_custom_call.1} parent=11 // pred_check_branch
        %410 = sbr.rel (%p408) target = $region36
      $region35: #{tpu_custom_call.1} parent=11 // pred_region
        _
      $region36: #{tpu_custom_call.1} parent=11 // pred_fallthru
        _
      // Predicated region
      $region37: #{tpu_custom_call.1} parent=11 // pred_check
        %p411 = pneg %p221
      $region38: #{tpu_custom_call.1} parent=11 // pred_check_branch
        %413 = sbr.rel (%p411) target = $region40
      $region39: #{tpu_custom_call.1} parent=11 // pred_region
        _
      $region40: #{tpu_custom_call.1} parent=11 // pred_fallthru
        _
      // Predicated region
      $region41: #{tpu_custom_call.1} parent=11 // pred_check
        %p414 = pneg %p242
      $region42: #{tpu_custom_call.1} parent=11 // pred_check_branch
        %416 = sbr.rel (%p414) target = $region44
      $region43: #{tpu_custom_call.1} parent=11 // pred_region
        _
      $region44: #{tpu_custom_call.1} parent=11 // pred_fallthru
        _
      // Predicated region
      $region45: #{tpu_custom_call.1} parent=11 // pred_check
        %p417 = pneg %p263
      $region46: #{tpu_custom_call.1} parent=11 // pred_check_branch
        %419 = sbr.rel (%p417) target = $region48
      $region47: #{tpu_custom_call.1} parent=11 // pred_region
        _
      $region48: #{tpu_custom_call.1} parent=11 // pred_fallthru
        _
      // Predicated region
      $region49: #{tpu_custom_call.1} parent=11 // pred_check
        %p420 = pneg %p284
      $region50: #{tpu_custom_call.1} parent=11 // pred_check_branch
        %422 = sbr.rel (%p420) target = $region52
      $region51: #{tpu_custom_call.1} parent=11 // pred_region
        _
      $region52: #{tpu_custom_call.1} parent=11 // pred_fallthru
        _
      // Predicated region
      $region53: #{tpu_custom_call.1} parent=11 // pred_check
        %p423 = pneg %p305
      $region54: #{tpu_custom_call.1} parent=11 // pred_check_branch
        %425 = sbr.rel (%p423) target = $region56
      $region55: #{tpu_custom_call.1} parent=11 // pred_region
        _
      $region56: #{tpu_custom_call.1} parent=11 // pred_fallthru
        _
      // Predicated region
      $region57: #{tpu_custom_call.1} parent=11 // pred_check
        %p426 = pneg %p326
      $region58: #{tpu_custom_call.1} parent=11 // pred_check_branch
        %428 = sbr.rel (%p426) target = $region60
      $region59: #{tpu_custom_call.1} parent=11 // pred_region
        _
      $region60: #{tpu_custom_call.1} parent=11 // pred_fallthru
        _
    $region12: #{tpu_custom_call.1} parent=5 // pred_fallthru
      _
    %p429 = scmp.lt.s32.totalorder %s22, 2
    // Predicated region
    $region61: #{tpu_custom_call.1} parent=5 // pred_check
      %p430 = pneg %p429
    $region62: #{tpu_custom_call.1} parent=5 // pred_check_branch
      %432 = sbr.rel (%p430) target = $region64
    $region63: #{tpu_custom_call.1} parent=5 // pred_region
      // Predicated region
      $region65: #{tpu_custom_call.1} parent=63 // pred_check
        %p433 = pneg %p42
      $region66: #{tpu_custom_call.1} parent=63 // pred_check_branch
        %435 = sbr.rel (%p433) target = $region68
      $region67: #{tpu_custom_call.1} parent=63 // pred_region
        %s436 = smul.u32 32, %s22
        %p437 = scmp.lt.s32.totalorder %s436, 63
        %s438 = scalar_select %p437, %s436, 63
        %s439 = smul.addr %s438, 8
        %s440 = scalar_lea.vmem %s0, %s439
        %s441 = smul.u32 32, %s22
      $region68: #{tpu_custom_call.1} parent=63 // pred_fallthru
        _
      // Predicated region
      $region69: #{tpu_custom_call.1} parent=63 // pred_check
        %p442 = pneg %p68
      $region70: #{tpu_custom_call.1} parent=63 // pred_check_branch
        %444 = sbr.rel (%p442) target = $region72
      $region71: #{tpu_custom_call.1} parent=63 // pred_region
        %s445 = smul.u32 32, %s22
        %p446 = scmp.lt.s32.totalorder %s445, 63
        %s447 = scalar_select %p446, %s445, 63
        %s448 = smul.addr %s447, 8
        %s449 = scalar_lea.vmem %s1, %s448
        %s450 = smul.u32 32, %s22
      $region72: #{tpu_custom_call.1} parent=63 // pred_fallthru
        _
    $region64: #{tpu_custom_call.1} parent=5 // pred_fallthru
      _
    %p451 = scmp.le.s32.totalorder 1, %s22
    %p452 = scmp.lt.s32.totalorder %s22, 3
    %p453 = pnand %p451, %p452
    %p454 = pneg %p453
    // Predicated region
    $region73: #{tpu_custom_call.1} parent=5 // pred_check
      _
    $region74: #{tpu_custom_call.1} parent=5 // pred_check_branch
      %456 = sbr.rel (%p453) target = $region76
    $region75: #{tpu_custom_call.1} parent=5 // pred_region
      %s457 = ssub.s32 %s22, 1
      %s458 = smul.u32 32, %s27
      %p459 = scmp.lt.s32.totalorder %s458, 63
      %s460 = scalar_select %p459, %s458, 63
      %s461 = smul.addr %s460, 8
      %s462 = scalar_lea.vmem %s0, %s461
      %p463 = pneg %p48
      %p464 = pneg %p45
      %s465 = smul.u32 32, %s27
      %p466 = scmp.lt.s32.totalorder %s465, 63
      %s467 = scalar_select %p466, %s465, 63
      %s468 = smul.addr %s467, 8
      %s469 = scalar_lea.vmem %s1, %s468
      %p470 = pneg %p74
      %p471 = pneg %p71
      %p472 = pneg %p95
      %p473 = pneg %p92
      %p474 = pneg %p116
      %p475 = pneg %p113
      %p476 = pneg %p137
      %p477 = pneg %p134
      %p478 = pneg %p158
      %p479 = pneg %p155
      %p480 = pneg %p179
      %p481 = pneg %p176
      %p482 = pneg %p200
      %p483 = pneg %p197
      %p484 = pneg %p221
      %p485 = pneg %p218
      %p486 = pneg %p242
      %p487 = pneg %p239
      %p488 = pneg %p263
      %p489 = pneg %p260
      %p490 = pneg %p284
      %p491 = pneg %p281
      %p492 = pneg %p305
      %p493 = pneg %p302
      %p494 = pneg %p326
      %p495 = pneg %p323
      %p496 = pneg %p352
      %p497 = pneg %p349
      %s498 = smul.u32 32, %s27
      %p499 = scmp.lt.s32.totalorder %s498, 63
      %s500 = scalar_select %p499, %s498, 63
      %s501 = smul.addr %s500, 8
      %s502 = scalar_lea.vmem %s14, %s501
      %p503 = pneg %p378
      %p504 = pneg %p375
      %s505 = smul.u32 32, %s27
      %p506 = scmp.lt.s32.totalorder %s505, 63
      %s507 = scalar_select %p506, %s505, 63
      %s508 = smul.addr %s507, 8
      %s509 = scalar_lea.vmem %s15, %s508
      %s510 = smul.u32 32, %s27
      %p511 = scmp.lt.s32.totalorder %s510, 63
      %s512 = scalar_select %p511, %s510, 63
      %s513 = smul.addr %s512, 8
      %s514 = scalar_lea.vmem %s0, %s513
      %s515 = smul.u32 32, %s27
      %s516 = smul.u32 32, %s27
      %p517 = scmp.lt.s32.totalorder %s516, 63
      %s518 = scalar_select %p517, %s516, 63
      %s519 = smul.addr %s518, 8
      %s520 = scalar_lea.vmem %s1, %s519
      %s521 = smul.u32 32, %s27
      %s522 = smul.u32 32, %s27
      %p523 = scmp.lt.s32.totalorder %s522, 63
      %s524 = scalar_select %p523, %s522, 63
      %s525 = smul.addr %s524, 8
      %s526 = scalar_lea.vmem %s14, %s525
      %s527 = smul.u32 32, %s27
      %s528 = smul.u32 32, %s27
      %p529 = scmp.lt.s32.totalorder %s528, 63
      %s530 = scalar_select %p529, %s528, 63
      %s531 = smul.addr %s530, 8
      %s532 = scalar_lea.vmem %s15, %s531
      %s533 = smul.u32 32, %s27
      %v534 = vld [vmem:[%s514] sm:$0xff]
      %v535 = vld [vmem:[%s514 + $0x8] sm:$0xff]
      %v536 = vld [vmem:[%s514 + $0x10] sm:$0xff]
      %v537 = vld [vmem:[%s514 + $0x18] sm:$0xff]
      %v538 = vld [vmem:[%s514 + $0x20] sm:$0xff]
      %v539 = vld [vmem:[%s514 + $0x28] sm:$0xff]
      %v540 = vld [vmem:[%s514 + $0x30] sm:$0xff]
      %v541 = vld [vmem:[%s514 + $0x38] sm:$0xff]
      %v542 = vld [vmem:[%s514 + $0x40] sm:$0xff]
      %v543 = vld [vmem:[%s514 + $0x48] sm:$0xff]
      %v544 = vld [vmem:[%s514 + $0x50] sm:$0xff]
      %v545 = vld [vmem:[%s514 + $0x58] sm:$0xff]
      %v546 = vld [vmem:[%s514 + $0x60] sm:$0xff]
      %v547 = vld [vmem:[%s514 + $0x68] sm:$0xff]
      %v548 = vld [vmem:[%s514 + $0x70] sm:$0xff]
      %v549 = vld [vmem:[%s514 + $0x78] sm:$0xff]
      %v550 = vld [vmem:[%s514 + $0x80] sm:$0xff]
      %v551 = vld [vmem:[%s514 + $0x88] sm:$0xff]
      %v552 = vld [vmem:[%s514 + $0x90] sm:$0xff]
      %v553 = vld [vmem:[%s514 + $0x98] sm:$0xff]
      %v554 = vld [vmem:[%s514 + $0xa0] sm:$0xff]
      %v555 = vld [vmem:[%s514 + $0xa8] sm:$0xff]
      %v556 = vld [vmem:[%s514 + $0xb0] sm:$0xff]
      %v557 = vld [vmem:[%s514 + $0xb8] sm:$0xff]
      %v558 = vld [vmem:[%s514 + $0xc0] sm:$0xff]
      %v559 = vld [vmem:[%s514 + $0xc8] sm:$0xff]
      %v560 = vld [vmem:[%s514 + $0xd0] sm:$0xff]
      %v561 = vld [vmem:[%s514 + $0xd8] sm:$0xff]
      %v562 = vld [vmem:[%s514 + $0xe0] sm:$0xff]
      %v563 = vld [vmem:[%s514 + $0xe8] sm:$0xff]
      %v564 = vld [vmem:[%s514 + $0xf0] sm:$0xff]
      %v565 = vld [vmem:[%s514 + $0xf8] sm:$0xff]
      %v566 = vld [vmem:[%s520] sm:$0xff]
      %v567 = vld [vmem:[%s520 + $0x8] sm:$0xff]
      %v568 = vld [vmem:[%s520 + $0x10] sm:$0xff]
      %v569 = vld [vmem:[%s520 + $0x18] sm:$0xff]
      %v570 = vld [vmem:[%s520 + $0x20] sm:$0xff]
      %v571 = vld [vmem:[%s520 + $0x28] sm:$0xff]
      %v572 = vld [vmem:[%s520 + $0x30] sm:$0xff]
      %v573 = vld [vmem:[%s520 + $0x38] sm:$0xff]
      %v574 = vld [vmem:[%s520 + $0x40] sm:$0xff]
      %v575 = vld [vmem:[%s520 + $0x48] sm:$0xff]
      %v576 = vld [vmem:[%s520 + $0x50] sm:$0xff]
      %v577 = vld [vmem:[%s520 + $0x58] sm:$0xff]
      %v578 = vld [vmem:[%s520 + $0x60] sm:$0xff]
      %v579 = vld [vmem:[%s520 + $0x68] sm:$0xff]
      %v580 = vld [vmem:[%s520 + $0x70] sm:$0xff]
      %v581 = vld [vmem:[%s520 + $0x78] sm:$0xff]
      %v582 = vld [vmem:[%s520 + $0x80] sm:$0xff]
      %v583 = vld [vmem:[%s520 + $0x88] sm:$0xff]
      %v584 = vld [vmem:[%s520 + $0x90] sm:$0xff]
      %v585 = vld [vmem:[%s520 + $0x98] sm:$0xff]
      %v586 = vld [vmem:[%s520 + $0xa0] sm:$0xff]
      %v587 = vld [vmem:[%s520 + $0xa8] sm:$0xff]
      %v588 = vld [vmem:[%s520 + $0xb0] sm:$0xff]
      %v589 = vld [vmem:[%s520 + $0xb8] sm:$0xff]
      %v590 = vld [vmem:[%s520 + $0xc0] sm:$0xff]
      %v591 = vld [vmem:[%s520 + $0xc8] sm:$0xff]
      %v592 = vld [vmem:[%s520 + $0xd0] sm:$0xff]
      %v593 = vld [vmem:[%s520 + $0xd8] sm:$0xff]
      %v594 = vld [vmem:[%s520 + $0xe0] sm:$0xff]
      %v595 = vld [vmem:[%s520 + $0xe8] sm:$0xff]
      %v596 = vld [vmem:[%s520 + $0xf0] sm:$0xff]
      %v597 = vld [vmem:[%s520 + $0xf8] sm:$0xff]
      %v598 = vld [vmem:[%s2] sm:$0xf]
      %v599 = vld [vmem:[%s3] sm:$0x1]
      %v601 = vlaneseq
      %v602 = vshrl.u32 %v601, 7
      %v603 = vsub.s32 0, %v602
      %v604 = vrot.slane %v599, %v603
      %vm606 = vcmask 31744
      %v608 = vsel %vm606, %v534, 0
      %v611 = vsel %vm606, %v535, 0
      %v614 = vsel %vm606, %v536, 0
      %v617 = vsel %vm606, %v537, 0
      %v620 = vsel %vm606, %v538, 0
      %v623 = vsel %vm606, %v539, 0
      %v626 = vsel %vm606, %v540, 0
      %v629 = vsel %vm606, %v541, 0
      %v632 = vsel %vm606, %v542, 0
      %v635 = vsel %vm606, %v543, 0
      %v638 = vsel %vm606, %v544, 0
      %v641 = vsel %vm606, %v545, 0
      %v644 = vsel %vm606, %v546, 0
      %v647 = vsel %vm606, %v547, 0
      %v650 = vsel %vm606, %v548, 0
      %v653 = vsel %vm606, %v549, 0
      %v656 = vsel %vm606, %v550, 0
      %v659 = vsel %vm606, %v551, 0
      %v662 = vsel %vm606, %v552, 0
      %v665 = vsel %vm606, %v553, 0
      %v668 = vsel %vm606, %v554, 0
      %v671 = vsel %vm606, %v555, 0
      %v674 = vsel %vm606, %v556, 0
      %v677 = vsel %vm606, %v557, 0
      %v680 = vsel %vm606, %v558, 0
      %v683 = vsel %vm606, %v559, 0
      %v686 = vsel %vm606, %v560, 0
      %v689 = vsel %vm606, %v561, 0
      %v692 = vsel %vm606, %v562, 0
      %v695 = vsel %vm606, %v563, 0
      %v698 = vsel %vm606, %v564, 0
      %v701 = vsel %vm606, %v565, 0
      %vm703 = vcmask 1043456
      %v705 = vsel %vm703, %v598, 0
      %707 = vmatprep.subr.mxu0 0.0
      %708 = vmatpush1.msra.mxu0 %v705
      %709 = vmatprep.subr.mxu0 0.0
      %710 = vmatpush1.msra.mxu0 0.0
      %711 = vmatprep.subr.mxu0 0.0
      %712 = vmatpush1.msra.mxu0 0.0
      %713 = vmatprep.subr.mxu0 0.0
      %714 = vmatpush1.msra.mxu0 0.0
      %715 = vmatprep.subr.mxu0 0.0
      %716 = vmatpush1.msra.mxu0 0.0
      %717 = vmatprep.subr.mxu0 0.0
      %718 = vmatpush1.msra.mxu0 0.0
      %719 = vmatprep.subr.mxu0 0.0
      %720 = vmatpush1.msra.mxu0 0.0
      %721 = vmatprep.subr.mxu0 0.0
      %722 = vmatpush1.msra.mxu0 0.0
      %723 = vmatprep.subr.mxu0 0.0
      %724 = vmatpush1.msra.mxu0 0.0
      %725 = vmatprep.subr.mxu0 0.0
      %726 = vmatpush1.msra.mxu0 0.0
      %727 = vmatprep.subr.mxu0 0.0
      %728 = vmatpush1.msra.mxu0 0.0
      %729 = vmatprep.subr.mxu0 0.0
      %730 = vmatpush1.msra.mxu0 0.0
      %731 = vmatprep.subr.mxu0 0.0
      %732 = vmatpush1.msra.mxu0 0.0
      %733 = vmatprep.subr.mxu0 0.0
      %734 = vmatpush1.msra.mxu0 0.0
      %735 = vmatprep.subr.mxu0 0.0
      %736 = vmatpush1.msra.mxu0 0.0
      %737 = vmatprep.subr.mxu0 0.0
      %738 = vmatpush1.msra.mxu0 0.0
      %739 = vmatprep.subr.mxu0 0.0
      %740 = vmatpush1.msra.mxu0 0.0
      %741 = vmatprep.subr.mxu0 0.0
      %742 = vmatpush1.msra.mxu0 0.0
      %743 = vmatprep.subr.mxu0 0.0
      %744 = vmatpush1.msra.mxu0 0.0
      %745 = vmatprep.subr.mxu0 0.0
      %746 = vmatpush1.msra.mxu0 0.0
      %747 = vmatprep.subr.mxu0 0.0
      %748 = vmatpush1.msra.mxu0 0.0
      %749 = vmatprep.subr.mxu0 0.0
      %750 = vmatpush1.msra.mxu0 0.0
      %751 = vmatprep.subr.mxu0 0.0
      %752 = vmatpush1.msra.mxu0 0.0
      %753 = vmatprep.subr.mxu0 0.0
      %754 = vmatpush1.msra.mxu0 0.0
      %755 = vmatprep.subr.mxu0 0.0
      %756 = vmatpush1.msra.mxu0 0.0
      %757 = vmatprep.subr.mxu0 0.0
      %758 = vmatpush1.msra.mxu0 0.0
      %759 = vmatprep.subr.mxu0 0.0
      %760 = vmatpush1.msra.mxu0 0.0
      %761 = vmatprep.subr.mxu0 0.0
      %762 = vmatpush1.msra.mxu0 0.0
      %763 = vmatprep.subr.mxu0 0.0
      %764 = vmatpush1.msra.mxu0 0.0
      %765 = vmatprep.subr.mxu0 0.0
      %766 = vmatpush1.msra.mxu0 0.0
      %767 = vmatprep.subr.mxu0 0.0
      %768 = vmatpush1.msra.mxu0 0.0
      %769 = vmatprep.subr.mxu0 0.0
      %770 = vmatpush1.msra.mxu0 0.0
      %771 = vmatprep.mubr.f32.mxu0 0.0
      %772 = vmatmul.mubr.f32.gmra.mrb[0].mxu0 %v608
      %v773 = vpop.f32.mrb[0].mxu0
      %v774 = vadd.f32 %v604, %v773
      %v775 = vpop.f32.mrb[0].mxu0
      %776 = vmatprep.mubr.f32.mxu0 0.0
      %777 = vmatmul.mubr.f32.gmra.mrb[0].mxu0 %v611
      %v778 = vpop.f32.mrb[0].mxu0
      %v779 = vadd.f32 %v604, %v778
      %v780 = vpop.f32.mrb[0].mxu0
      %781 = vmatprep.mubr.f32.mxu0 0.0
      %782 = vmatmul.mubr.f32.gmra.mrb[0].mxu0 %v614
      %v783 = vpop.f32.mrb[0].mxu0
      %v784 = vadd.f32 %v604, %v783
      %v785 = vpop.f32.mrb[0].mxu0
      %786 = vmatprep.mubr.f32.mxu0 0.0
      %787 = vmatmul.mubr.f32.gmra.mrb[0].mxu0 %v617
      %v788 = vpop.f32.mrb[0].mxu0
      %v789 = vadd.f32 %v604, %v788
      %v790 = vpop.f32.mrb[0].mxu0
      %791 = vmatprep.mubr.f32.mxu0 0.0
      %792 = vmatmul.mubr.f32.gmra.mrb[0].mxu0 %v620
      %v793 = vpop.f32.mrb[0].mxu0
      %v794 = vadd.f32 %v604, %v793
      %v795 = vpop.f32.mrb[0].mxu0
      %796 = vmatprep.mubr.f32.mxu0 0.0
      %797 = vmatmul.mubr.f32.gmra.mrb[0].mxu0 %v623
      %v798 = vpop.f32.mrb[0].mxu0
      %v799 = vadd.f32 %v604, %v798
      %v800 = vpop.f32.mrb[0].mxu0
      %801 = vmatprep.mubr.f32.mxu0 0.0
      %802 = vmatmul.mubr.f32.gmra.mrb[0].mxu0 %v626
      %v803 = vpop.f32.mrb[0].mxu0
      %v804 = vadd.f32 %v604, %v803
      %v805 = vpop.f32.mrb[0].mxu0
      %806 = vmatprep.mubr.f32.mxu0 0.0
      %807 = vmatmul.mubr.f32.gmra.mrb[0].mxu0 %v629
      %v808 = vpop.f32.mrb[0].mxu0
      %v809 = vadd.f32 %v604, %v808
      %v810 = vpop.f32.mrb[0].mxu0
      %811 = vmatprep.mubr.f32.mxu0 0.0
      %812 = vmatmul.mubr.f32.gmra.mrb[0].mxu0 %v632
      %v813 = vpop.f32.mrb[0].mxu0
      %v814 = vadd.f32 %v604, %v813
      %v815 = vpop.f32.mrb[0].mxu0
      %816 = vmatprep.mubr.f32.mxu0 0.0
      %817 = vmatmul.mubr.f32.gmra.mrb[0].mxu0 %v635
      %v818 = vpop.f32.mrb[0].mxu0
      %v819 = vadd.f32 %v604, %v818
      %v820 = vpop.f32.mrb[0].mxu0
      %821 = vmatprep.mubr.f32.mxu0 0.0
      %822 = vmatmul.mubr.f32.gmra.mrb[0].mxu0 %v638
      %v823 = vpop.f32.mrb[0].mxu0
      %v824 = vadd.f32 %v604, %v823
      %v825 = vpop.f32.mrb[0].mxu0
      %826 = vmatprep.mubr.f32.mxu0 0.0
      %827 = vmatmul.mubr.f32.gmra.mrb[0].mxu0 %v641
      %v828 = vpop.f32.mrb[0].mxu0
      %v829 = vadd.f32 %v604, %v828
      %v830 = vpop.f32.mrb[0].mxu0
      %831 = vmatprep.mubr.f32.mxu0 0.0
      %832 = vmatmul.mubr.f32.gmra.mrb[0].mxu0 %v644
      %v833 = vpop.f32.mrb[0].mxu0
      %v834 = vadd.f32 %v604, %v833
      %v835 = vpop.f32.mrb[0].mxu0
      %836 = vmatprep.mubr.f32.mxu0 0.0
      %837 = vmatmul.mubr.f32.gmra.mrb[0].mxu0 %v647
      %v838 = vpop.f32.mrb[0].mxu0
      %v839 = vadd.f32 %v604, %v838
      %v840 = vpop.f32.mrb[0].mxu0
      %841 = vmatprep.mubr.f32.mxu0 0.0
      %842 = vmatmul.mubr.f32.gmra.mrb[0].mxu0 %v650
      %v843 = vpop.f32.mrb[0].mxu0
      %v844 = vadd.f32 %v604, %v843
      %v845 = vpop.f32.mrb[0].mxu0
      %846 = vmatprep.mubr.f32.mxu0 0.0
      %847 = vmatmul.mubr.f32.gmra.mrb[0].mxu0 %v653
      %v848 = vpop.f32.mrb[0].mxu0
      %v849 = vadd.f32 %v604, %v848
      %v850 = vpop.f32.mrb[0].mxu0
      %851 = vmatprep.mubr.f32.mxu0 0.0
      %852 = vmatmul.mubr.f32.gmra.mrb[0].mxu0 %v656
      %v853 = vpop.f32.mrb[0].mxu0
      %v854 = vadd.f32 %v604, %v853
      %v855 = vpop.f32.mrb[0].mxu0
      %856 = vmatprep.mubr.f32.mxu0 0.0
      %857 = vmatmul.mubr.f32.gmra.mrb[0].mxu0 %v659
      %v858 = vpop.f32.mrb[0].mxu0
      %v859 = vadd.f32 %v604, %v858
      %v860 = vpop.f32.mrb[0].mxu0
      %861 = vmatprep.mubr.f32.mxu0 0.0
      %862 = vmatmul.mubr.f32.gmra.mrb[0].mxu0 %v662
      %v863 = vpop.f32.mrb[0].mxu0
      %v864 = vadd.f32 %v604, %v863
      %v865 = vpop.f32.mrb[0].mxu0
      %866 = vmatprep.mubr.f32.mxu0 0.0
      %867 = vmatmul.mubr.f32.gmra.mrb[0].mxu0 %v665
      %v868 = vpop.f32.mrb[0].mxu0
      %v869 = vadd.f32 %v604, %v868
      %v870 = vpop.f32.mrb[0].mxu0
      %871 = vmatprep.mubr.f32.mxu0 0.0
      %872 = vmatmul.mubr.f32.gmra.mrb[0].mxu0 %v668
      %v873 = vpop.f32.mrb[0].mxu0
      %v874 = vadd.f32 %v604, %v873
      %v875 = vpop.f32.mrb[0].mxu0
      %876 = vmatprep.mubr.f32.mxu0 0.0
      %877 = vmatmul.mubr.f32.gmra.mrb[0].mxu0 %v671
      %v878 = vpop.f32.mrb[0].mxu0
      %v879 = vadd.f32 %v604, %v878
      %v880 = vpop.f32.mrb[0].mxu0
      %881 = vmatprep.mubr.f32.mxu0 0.0
      %882 = vmatmul.mubr.f32.gmra.mrb[0].mxu0 %v674
      %v883 = vpop.f32.mrb[0].mxu0
      %v884 = vadd.f32 %v604, %v883
      %v885 = vpop.f32.mrb[0].mxu0
      %886 = vmatprep.mubr.f32.mxu0 0.0
      %887 = vmatmul.mubr.f32.gmra.mrb[0].mxu0 %v677
      %v888 = vpop.f32.mrb[0].mxu0
      %v889 = vadd.f32 %v604, %v888
      %v890 = vpop.f32.mrb[0].mxu0
      %891 = vmatprep.mubr.f32.mxu0 0.0
      %892 = vmatmul.mubr.f32.gmra.mrb[0].mxu0 %v680
      %v893 = vpop.f32.mrb[0].mxu0
      %v894 = vadd.f32 %v604, %v893
      %v895 = vpop.f32.mrb[0].mxu0
      %896 = vmatprep.mubr.f32.mxu0 0.0
      %897 = vmatmul.mubr.f32.gmra.mrb[0].mxu0 %v683
      %v898 = vpop.f32.mrb[0].mxu0
      %v899 = vadd.f32 %v604, %v898
      %v900 = vpop.f32.mrb[0].mxu0
      %901 = vmatprep.mubr.f32.mxu0 0.0
      %902 = vmatmul.mubr.f32.gmra.mrb[0].mxu0 %v686
      %v903 = vpop.f32.mrb[0].mxu0
      %v904 = vadd.f32 %v604, %v903
      %v905 = vpop.f32.mrb[0].mxu0
      %906 = vmatprep.mubr.f32.mxu0 0.0
      %907 = vmatmul.mubr.f32.gmra.mrb[0].mxu0 %v689
      %v908 = vpop.f32.mrb[0].mxu0
      %v909 = vadd.f32 %v604, %v908
      %v910 = vpop.f32.mrb[0].mxu0
      %911 = vmatprep.mubr.f32.mxu0 0.0
      %912 = vmatmul.mubr.f32.gmra.mrb[0].mxu0 %v692
      %v913 = vpop.f32.mrb[0].mxu0
      %v914 = vadd.f32 %v604, %v913
      %v915 = vpop.f32.mrb[0].mxu0
      %916 = vmatprep.mubr.f32.mxu0 0.0
      %917 = vmatmul.mubr.f32.gmra.mrb[0].mxu0 %v695
      %v918 = vpop.f32.mrb[0].mxu0
      %v919 = vadd.f32 %v604, %v918
      %v920 = vpop.f32.mrb[0].mxu0
      %921 = vmatprep.mubr.f32.mxu0 0.0
      %922 = vmatmul.mubr.f32.gmra.mrb[0].mxu0 %v698
      %v923 = vpop.f32.mrb[0].mxu0
      %v924 = vadd.f32 %v604, %v923
      %v925 = vpop.f32.mrb[0].mxu0
      %926 = vmatprep.mubr.f32.mxu0 0.0
      %927 = vmatmul.mubr.f32.gmra.mrb[0].mxu0 %v701
      %v928 = vpop.f32.mrb[0].mxu0
      %v929 = vadd.f32 %v604, %v928
      %v930 = vpop.f32.mrb[0].mxu0
      %931 = vdwg.mxu0
      %v932 = vmax.f32 %v774, 0.0
      %v933 = vmax.f32 %v779, 0.0
      %v934 = vmax.f32 %v784, 0.0
      %v935 = vmax.f32 %v789, 0.0
      %v936 = vmax.f32 %v794, 0.0
      %v937 = vmax.f32 %v799, 0.0
      %v938 = vmax.f32 %v804, 0.0
      %v939 = vmax.f32 %v809, 0.0
      %v940 = vmax.f32 %v814, 0.0
      %v941 = vmax.f32 %v819, 0.0
      %v942 = vmax.f32 %v824, 0.0
      %v943 = vmax.f32 %v829, 0.0
      %v944 = vmax.f32 %v834, 0.0
      %v945 = vmax.f32 %v839, 0.0
      %v946 = vmax.f32 %v844, 0.0
      %v947 = vmax.f32 %v849, 0.0
      %v948 = vmax.f32 %v854, 0.0
      %v949 = vmax.f32 %v859, 0.0
      %v950 = vmax.f32 %v864, 0.0
      %v951 = vmax.f32 %v869, 0.0
      %v952 = vmax.f32 %v874, 0.0
      %v953 = vmax.f32 %v879, 0.0
      %v954 = vmax.f32 %v884, 0.0
      %v955 = vmax.f32 %v889, 0.0
      %v956 = vmax.f32 %v894, 0.0
      %v957 = vmax.f32 %v899, 0.0
      %v958 = vmax.f32 %v904, 0.0
      %v959 = vmax.f32 %v909, 0.0
      %v960 = vmax.f32 %v914, 0.0
      %v961 = vmax.f32 %v919, 0.0
      %v962 = vmax.f32 %v924, 0.0
      %v963 = vmax.f32 %v929, 0.0
      %v964 = vld [vmem:[%s4] sm:$0xff]
      %v965 = vld [vmem:[%s4 + $0x8] sm:$0xff]
      %v966 = vld [vmem:[%s4 + $0x10] sm:$0xff]
      %v967 = vld [vmem:[%s4 + $0x18] sm:$0xff]
      %v968 = vld [vmem:[%s5] sm:$0x1]
      %v970 = vlaneseq
      %v971 = vshrl.u32 %v970, 7
      %v972 = vsub.s32 0, %v971
      %v973 = vrot.slane %v968, %v972
      %vm975 = vcmask 261120
      %v977 = vsel %vm975, %v932, 0
      %v980 = vsel %vm975, %v933, 0
      %v983 = vsel %vm975, %v934, 0
      %v986 = vsel %vm975, %v935, 0
      %v989 = vsel %vm975, %v936, 0
      %v992 = vsel %vm975, %v937, 0
      %v995 = vsel %vm975, %v938, 0
      %v998 = vsel %vm975, %v939, 0
      %v1001 = vsel %vm975, %v940, 0
      %v1004 = vsel %vm975, %v941, 0
      %v1007 = vsel %vm975, %v942, 0
      %v1010 = vsel %vm975, %v943, 0
      %v1013 = vsel %vm975, %v944, 0
      %v1016 = vsel %vm975, %v945, 0
      %v1019 = vsel %vm975, %v946, 0
      %v1022 = vsel %vm975, %v947, 0
      %v1025 = vsel %vm975, %v948, 0
      %v1028 = vsel %vm975, %v949, 0
      %v1031 = vsel %vm975, %v950, 0
      %v1034 = vsel %vm975, %v951, 0
      %v1037 = vsel %vm975, %v952, 0
      %v1040 = vsel %vm975, %v953, 0
      %v1043 = vsel %vm975, %v954, 0
      %v1046 = vsel %vm975, %v955, 0
      %v1049 = vsel %vm975, %v956, 0
      %v1052 = vsel %vm975, %v957, 0
      %v1055 = vsel %vm975, %v958, 0
      %v1058 = vsel %vm975, %v959, 0
      %v1061 = vsel %vm975, %v960, 0
      %v1064 = vsel %vm975, %v961, 0
      %v1067 = vsel %vm975, %v962, 0
      %v1070 = vsel %vm975, %v963, 0
      %1072 = vmatprep.subr.mxu0 0.0
      %1073 = vmatpush1.msra.mxu0 %v964
      %1074 = vmatprep.subr.mxu0 0.0
      %1075 = vmatpush1.msra.mxu0 %v965
      %1076 = vmatprep.subr.mxu0 0.0
      %1077 = vmatpush1.msra.mxu0 %v966
      %1078 = vmatprep.subr.mxu0 0.0
      %1079 = vmatpush1.msra.mxu0 %v967
      %1080 = vmatprep.subr.mxu0 0.0
      %1081 = vmatpush1.msra.mxu0 0.0
      %1082 = vmatprep.subr.mxu0 0.0
      %1083 = vmatpush1.msra.mxu0 0.0
      %1084 = vmatprep.subr.mxu0 0.0
      %1085 = vmatpush1.msra.mxu0 0.0
      %1086 = vmatprep.subr.mxu0 0.0
      %1087 = vmatpush1.msra.mxu0 0.0
      %1088 = vmatprep.subr.mxu0 0.0
      %1089 = vmatpush1.msra.mxu0 0.0
      %1090 = vmatprep.subr.mxu0 0.0
      %1091 = vmatpush1.msra.mxu0 0.0
      %1092 = vmatprep.subr.mxu0 0.0
      %1093 = vmatpush1.msra.mxu0 0.0
      %1094 = vmatprep.subr.mxu0 0.0
      %1095 = vmatpush1.msra.mxu0 0.0
      %1096 = vmatprep.subr.mxu0 0.0
      %1097 = vmatpush1.msra.mxu0 0.0
      %1098 = vmatprep.subr.mxu0 0.0
      %1099 = vmatpush1.msra.mxu0 0.0
      %1100 = vmatprep.subr.mxu0 0.0
      %1101 = vmatpush1.msra.mxu0 0.0
      %1102 = vmatprep.subr.mxu0 0.0
      %1103 = vmatpush1.msra.mxu0 0.0
      %1104 = vmatprep.subr.mxu0 0.0
      %1105 = vmatpush1.msra.mxu0 0.0
      %1106 = vmatprep.subr.mxu0 0.0
      %1107 = vmatpush1.msra.mxu0 0.0
      %1108 = vmatprep.subr.mxu0 0.0
      %1109 = vmatpush1.msra.mxu0 0.0
      %1110 = vmatprep.subr.mxu0 0.0
      %1111 = vmatpush1.msra.mxu0 0.0
      %1112 = vmatprep.subr.mxu0 0.0
      %1113 = vmatpush1.msra.mxu0 0.0
      %1114 = vmatprep.subr.mxu0 0.0
      %1115 = vmatpush1.msra.mxu0 0.0
      %1116 = vmatprep.subr.mxu0 0.0
      %1117 = vmatpush1.msra.mxu0 0.0
      %1118 = vmatprep.subr.mxu0 0.0
      %1119 = vmatpush1.msra.mxu0 0.0
      %1120 = vmatprep.subr.mxu0 0.0
      %1121 = vmatpush1.msra.mxu0 0.0
      %1122 = vmatprep.subr.mxu0 0.0
      %1123 = vmatpush1.msra.mxu0 0.0
      %1124 = vmatprep.subr.mxu0 0.0
      %1125 = vmatpush1.msra.mxu0 0.0
      %1126 = vmatprep.subr.mxu0 0.0
      %1127 = vmatpush1.msra.mxu0 0.0
      %1128 = vmatprep.subr.mxu0 0.0
      %1129 = vmatpush1.msra.mxu0 0.0
      %1130 = vmatprep.subr.mxu0 0.0
      %1131 = vmatpush1.msra.mxu0 0.0
      %1132 = vmatprep.subr.mxu0 0.0
      %1133 = vmatpush1.msra.mxu0 0.0
      %1134 = vmatprep.subr.mxu0 0.0
      %1135 = vmatpush1.msra.mxu0 0.0
      %1136 = vmatprep.mubr.f32.mxu0 0.0
      %1137 = vmatmul.mubr.f32.gmra.mrb[0].mxu0 %v977
      %v1138 = vpop.f32.mrb[0].mxu0
      %v1139 = vadd.f32 %v973, %v1138
      %v1140 = vpop.f32.mrb[0].mxu0
      %1141 = vmatprep.mubr.f32.mxu0 0.0
      %1142 = vmatmul.mubr.f32.gmra.mrb[0].mxu0 %v980
      %v1143 = vpop.f32.mrb[0].mxu0
      %v1144 = vadd.f32 %v973, %v1143
      %v1145 = vpop.f32.mrb[0].mxu0
      %1146 = vmatprep.mubr.f32.mxu0 0.0
      %1147 = vmatmul.mubr.f32.gmra.mrb[0].mxu0 %v983
      %v1148 = vpop.f32.mrb[0].mxu0
      %v1149 = vadd.f32 %v973, %v1148
      %v1150 = vpop.f32.mrb[0].mxu0
      %1151 = vmatprep.mubr.f32.mxu0 0.0
      %1152 = vmatmul.mubr.f32.gmra.mrb[0].mxu0 %v986
      %v1153 = vpop.f32.mrb[0].mxu0
      %v1154 = vadd.f32 %v973, %v1153
      %v1155 = vpop.f32.mrb[0].mxu0
      %1156 = vmatprep.mubr.f32.mxu0 0.0
      %1157 = vmatmul.mubr.f32.gmra.mrb[0].mxu0 %v989
      %v1158 = vpop.f32.mrb[0].mxu0
      %v1159 = vadd.f32 %v973, %v1158
      %v1160 = vpop.f32.mrb[0].mxu0
      %1161 = vmatprep.mubr.f32.mxu0 0.0
      %1162 = vmatmul.mubr.f32.gmra.mrb[0].mxu0 %v992
      %v1163 = vpop.f32.mrb[0].mxu0
      %v1164 = vadd.f32 %v973, %v1163
      %v1165 = vpop.f32.mrb[0].mxu0
      %1166 = vmatprep.mubr.f32.mxu0 0.0
      %1167 = vmatmul.mubr.f32.gmra.mrb[0].mxu0 %v995
      %v1168 = vpop.f32.mrb[0].mxu0
      %v1169 = vadd.f32 %v973, %v1168
      %v1170 = vpop.f32.mrb[0].mxu0
      %1171 = vmatprep.mubr.f32.mxu0 0.0
      %1172 = vmatmul.mubr.f32.gmra.mrb[0].mxu0 %v998
      %v1173 = vpop.f32.mrb[0].mxu0
      %v1174 = vadd.f32 %v973, %v1173
      %v1175 = vpop.f32.mrb[0].mxu0
      %1176 = vmatprep.mubr.f32.mxu0 0.0
      %1177 = vmatmul.mubr.f32.gmra.mrb[0].mxu0 %v1001
      %v1178 = vpop.f32.mrb[0].mxu0
      %v1179 = vadd.f32 %v973, %v1178
      %v1180 = vpop.f32.mrb[0].mxu0
      %1181 = vmatprep.mubr.f32.mxu0 0.0
      %1182 = vmatmul.mubr.f32.gmra.mrb[0].mxu0 %v1004
      %v1183 = vpop.f32.mrb[0].mxu0
      %v1184 = vadd.f32 %v973, %v1183
      %v1185 = vpop.f32.mrb[0].mxu0
      %1186 = vmatprep.mubr.f32.mxu0 0.0
      %1187 = vmatmul.mubr.f32.gmra.mrb[0].mxu0 %v1007
      %v1188 = vpop.f32.mrb[0].mxu0
      %v1189 = vadd.f32 %v973, %v1188
      %v1190 = vpop.f32.mrb[0].mxu0
      %1191 = vmatprep.mubr.f32.mxu0 0.0
      %1192 = vmatmul.mubr.f32.gmra.mrb[0].mxu0 %v1010
      %v1193 = vpop.f32.mrb[0].mxu0
      %v1194 = vadd.f32 %v973, %v1193
      %v1195 = vpop.f32.mrb[0].mxu0
      %1196 = vmatprep.mubr.f32.mxu0 0.0
      %1197 = vmatmul.mubr.f32.gmra.mrb[0].mxu0 %v1013
      %v1198 = vpop.f32.mrb[0].mxu0
      %v1199 = vadd.f32 %v973, %v1198
      %v1200 = vpop.f32.mrb[0].mxu0
      %1201 = vmatprep.mubr.f32.mxu0 0.0
      %1202 = vmatmul.mubr.f32.gmra.mrb[0].mxu0 %v1016
      %v1203 = vpop.f32.mrb[0].mxu0
      %v1204 = vadd.f32 %v973, %v1203
      %v1205 = vpop.f32.mrb[0].mxu0
      %1206 = vmatprep.mubr.f32.mxu0 0.0
      %1207 = vmatmul.mubr.f32.gmra.mrb[0].mxu0 %v1019
      %v1208 = vpop.f32.mrb[0].mxu0
      %v1209 = vadd.f32 %v973, %v1208
      %v1210 = vpop.f32.mrb[0].mxu0
      %1211 = vmatprep.mubr.f32.mxu0 0.0
      %1212 = vmatmul.mubr.f32.gmra.mrb[0].mxu0 %v1022
      %v1213 = vpop.f32.mrb[0].mxu0
      %v1214 = vadd.f32 %v973, %v1213
      %v1215 = vpop.f32.mrb[0].mxu0
      %1216 = vmatprep.mubr.f32.mxu0 0.0
      %1217 = vmatmul.mubr.f32.gmra.mrb[0].mxu0 %v1025
      %v1218 = vpop.f32.mrb[0].mxu0
      %v1219 = vadd.f32 %v973, %v1218
      %v1220 = vpop.f32.mrb[0].mxu0
      %1221 = vmatprep.mubr.f32.mxu0 0.0
      %1222 = vmatmul.mubr.f32.gmra.mrb[0].mxu0 %v1028
      %v1223 = vpop.f32.mrb[0].mxu0
      %v1224 = vadd.f32 %v973, %v1223
      %v1225 = vpop.f32.mrb[0].mxu0
      %1226 = vmatprep.mubr.f32.mxu0 0.0
      %1227 = vmatmul.mubr.f32.gmra.mrb[0].mxu0 %v1031
      %v1228 = vpop.f32.mrb[0].mxu0
      %v1229 = vadd.f32 %v973, %v1228
      %v1230 = vpop.f32.mrb[0].mxu0
      %1231 = vmatprep.mubr.f32.mxu0 0.0
      %1232 = vmatmul.mubr.f32.gmra.mrb[0].mxu0 %v1034
      %v1233 = vpop.f32.mrb[0].mxu0
      %v1234 = vadd.f32 %v973, %v1233
      %v1235 = vpop.f32.mrb[0].mxu0
      %1236 = vmatprep.mubr.f32.mxu0 0.0
      %1237 = vmatmul.mubr.f32.gmra.mrb[0].mxu0 %v1037
      %v1238 = vpop.f32.mrb[0].mxu0
      %v1239 = vadd.f32 %v973, %v1238
      %v1240 = vpop.f32.mrb[0].mxu0
      %1241 = vmatprep.mubr.f32.mxu0 0.0
      %1242 = vmatmul.mubr.f32.gmra.mrb[0].mxu0 %v1040
      %v1243 = vpop.f32.mrb[0].mxu0
      %v1244 = vadd.f32 %v973, %v1243
      %v1245 = vpop.f32.mrb[0].mxu0
      %1246 = vmatprep.mubr.f32.mxu0 0.0
      %1247 = vmatmul.mubr.f32.gmra.mrb[0].mxu0 %v1043
      %v1248 = vpop.f32.mrb[0].mxu0
      %v1249 = vadd.f32 %v973, %v1248
      %v1250 = vpop.f32.mrb[0].mxu0
      %1251 = vmatprep.mubr.f32.mxu0 0.0
      %1252 = vmatmul.mubr.f32.gmra.mrb[0].mxu0 %v1046
      %v1253 = vpop.f32.mrb[0].mxu0
      %v1254 = vadd.f32 %v973, %v1253
      %v1255 = vpop.f32.mrb[0].mxu0
      %1256 = vmatprep.mubr.f32.mxu0 0.0
      %1257 = vmatmul.mubr.f32.gmra.mrb[0].mxu0 %v1049
      %v1258 = vpop.f32.mrb[0].mxu0
      %v1259 = vadd.f32 %v973, %v1258
      %v1260 = vpop.f32.mrb[0].mxu0
      %1261 = vmatprep.mubr.f32.mxu0 0.0
      %1262 = vmatmul.mubr.f32.gmra.mrb[0].mxu0 %v1052
      %v1263 = vpop.f32.mrb[0].mxu0
      %v1264 = vadd.f32 %v973, %v1263
      %v1265 = vpop.f32.mrb[0].mxu0
      %1266 = vmatprep.mubr.f32.mxu0 0.0
      %1267 = vmatmul.mubr.f32.gmra.mrb[0].mxu0 %v1055
      %v1268 = vpop.f32.mrb[0].mxu0
      %v1269 = vadd.f32 %v973, %v1268
      %v1270 = vpop.f32.mrb[0].mxu0
      %1271 = vmatprep.mubr.f32.mxu0 0.0
      %1272 = vmatmul.mubr.f32.gmra.mrb[0].mxu0 %v1058
      %v1273 = vpop.f32.mrb[0].mxu0
      %v1274 = vadd.f32 %v973, %v1273
      %v1275 = vpop.f32.mrb[0].mxu0
      %1276 = vmatprep.mubr.f32.mxu0 0.0
      %1277 = vmatmul.mubr.f32.gmra.mrb[0].mxu0 %v1061
      %v1278 = vpop.f32.mrb[0].mxu0
      %v1279 = vadd.f32 %v973, %v1278
      %v1280 = vpop.f32.mrb[0].mxu0
      %1281 = vmatprep.mubr.f32.mxu0 0.0
      %1282 = vmatmul.mubr.f32.gmra.mrb[0].mxu0 %v1064
      %v1283 = vpop.f32.mrb[0].mxu0
      %v1284 = vadd.f32 %v973, %v1283
      %v1285 = vpop.f32.mrb[0].mxu0
      %1286 = vmatprep.mubr.f32.mxu0 0.0
      %1287 = vmatmul.mubr.f32.gmra.mrb[0].mxu0 %v1067
      %v1288 = vpop.f32.mrb[0].mxu0
      %v1289 = vadd.f32 %v973, %v1288
      %v1290 = vpop.f32.mrb[0].mxu0
      %1291 = vmatprep.mubr.f32.mxu0 0.0
      %1292 = vmatmul.mubr.f32.gmra.mrb[0].mxu0 %v1070
      %v1293 = vpop.f32.mrb[0].mxu0
      %v1294 = vadd.f32 %v973, %v1293
      %v1295 = vpop.f32.mrb[0].mxu0
      %1296 = vdwg.mxu0
      %v1297 = vld [vmem:[%s6] sm:$0xf]
      %v1298 = vld [vmem:[%s7] sm:$0x1]
      %v1300 = vlaneseq
      %v1301 = vshrl.u32 %v1300, 7
      %v1302 = vsub.s32 0, %v1301
      %v1303 = vrot.slane %v1298, %v1302
      %v1306 = vsel %vm606, %v566, 0
      %v1309 = vsel %vm606, %v567, 0
      %v1312 = vsel %vm606, %v568, 0
      %v1315 = vsel %vm606, %v569, 0
      %v1318 = vsel %vm606, %v570, 0
      %v1321 = vsel %vm606, %v571, 0
      %v1324 = vsel %vm606, %v572, 0
      %v1327 = vsel %vm606, %v573, 0
      %v1330 = vsel %vm606, %v574, 0
      %v1333 = vsel %vm606, %v575, 0
      %v1336 = vsel %vm606, %v576, 0
      %v1339 = vsel %vm606, %v577, 0
      %v1342 = vsel %vm606, %v578, 0
      %v1345 = vsel %vm606, %v579, 0
      %v1348 = vsel %vm606, %v580, 0
      %v1351 = vsel %vm606, %v581, 0
      %v1354 = vsel %vm606, %v582, 0
      %v1357 = vsel %vm606, %v583, 0
      %v1360 = vsel %vm606, %v584, 0
      %v1363 = vsel %vm606, %v585, 0
      %v1366 = vsel %vm606, %v586, 0
      %v1369 = vsel %vm606, %v587, 0
      %v1372 = vsel %vm606, %v588, 0
      %v1375 = vsel %vm606, %v589, 0
      %v1378 = vsel %vm606, %v590, 0
      %v1381 = vsel %vm606, %v591, 0
      %v1384 = vsel %vm606, %v592, 0
      %v1387 = vsel %vm606, %v593, 0
      %v1390 = vsel %vm606, %v594, 0
      %v1393 = vsel %vm606, %v595, 0
      %v1396 = vsel %vm606, %v596, 0
      %v1399 = vsel %vm606, %v597, 0
      %v1402 = vsel %vm703, %v1297, 0
      %1404 = vmatprep.subr.mxu0 0.0
      %1405 = vmatpush1.msra.mxu0 %v1402
      %1406 = vmatprep.subr.mxu0 0.0
      %1407 = vmatpush1.msra.mxu0 0.0
      %1408 = vmatprep.subr.mxu0 0.0
      %1409 = vmatpush1.msra.mxu0 0.0
      %1410 = vmatprep.subr.mxu0 0.0
      %1411 = vmatpush1.msra.mxu0 0.0
      %1412 = vmatprep.subr.mxu0 0.0
      %1413 = vmatpush1.msra.mxu0 0.0
      %1414 = vmatprep.subr.mxu0 0.0
      %1415 = vmatpush1.msra.mxu0 0.0
      %1416 = vmatprep.subr.mxu0 0.0
      %1417 = vmatpush1.msra.mxu0 0.0
      %1418 = vmatprep.subr.mxu0 0.0
      %1419 = vmatpush1.msra.mxu0 0.0
      %1420 = vmatprep.subr.mxu0 0.0
      %1421 = vmatpush1.msra.mxu0 0.0
      %1422 = vmatprep.subr.mxu0 0.0
      %1423 = vmatpush1.msra.mxu0 0.0
      %1424 = vmatprep.subr.mxu0 0.0
      %1425 = vmatpush1.msra.mxu0 0.0
      %1426 = vmatprep.subr.mxu0 0.0
      %1427 = vmatpush1.msra.mxu0 0.0
      %1428 = vmatprep.subr.mxu0 0.0
      %1429 = vmatpush1.msra.mxu0 0.0
      %1430 = vmatprep.subr.mxu0 0.0
      %1431 = vmatpush1.msra.mxu0 0.0
      %1432 = vmatprep.subr.mxu0 0.0
      %1433 = vmatpush1.msra.mxu0 0.0
      %1434 = vmatprep.subr.mxu0 0.0
      %1435 = vmatpush1.msra.mxu0 0.0
      %1436 = vmatprep.subr.mxu0 0.0
      %1437 = vmatpush1.msra.mxu0 0.0
      %1438 = vmatprep.subr.mxu0 0.0
      %1439 = vmatpush1.msra.mxu0 0.0
      %1440 = vmatprep.subr.mxu0 0.0
      %1441 = vmatpush1.msra.mxu0 0.0
      %1442 = vmatprep.subr.mxu0 0.0
      %1443 = vmatpush1.msra.mxu0 0.0
      %1444 = vmatprep.subr.mxu0 0.0
      %1445 = vmatpush1.msra.mxu0 0.0
      %1446 = vmatprep.subr.mxu0 0.0
      %1447 = vmatpush1.msra.mxu0 0.0
      %1448 = vmatprep.subr.mxu0 0.0
      %1449 = vmatpush1.msra.mxu0 0.0
      %1450 = vmatprep.subr.mxu0 0.0
      %1451 = vmatpush1.msra.mxu0 0.0
      %1452 = vmatprep.subr.mxu0 0.0
      %1453 = vmatpush1.msra.mxu0 0.0
      %1454 = vmatprep.subr.mxu0 0.0
      %1455 = vmatpush1.msra.mxu0 0.0
      %1456 = vmatprep.subr.mxu0 0.0
      %1457 = vmatpush1.msra.mxu0 0.0
      %1458 = vmatprep.subr.mxu0 0.0
      %1459 = vmatpush1.msra.mxu0 0.0
      %1460 = vmatprep.subr.mxu0 0.0
      %1461 = vmatpush1.msra.mxu0 0.0
      %1462 = vmatprep.subr.mxu0 0.0
      %1463 = vmatpush1.msra.mxu0 0.0
      %1464 = vmatprep.subr.mxu0 0.0
      %1465 = vmatpush1.msra.mxu0 0.0
      %1466 = vmatprep.subr.mxu0 0.0
      %1467 = vmatpush1.msra.mxu0 0.0
      %1468 = vmatprep.mubr.f32.mxu0 0.0
      %1469 = vmatmul.mubr.f32.gmra.mrb[0].mxu0 %v1306
      %v1470 = vpop.f32.mrb[0].mxu0
      %v1471 = vadd.f32 %v1303, %v1470
      %v1472 = vpop.f32.mrb[0].mxu0
      %1473 = vmatprep.mubr.f32.mxu0 0.0
      %1474 = vmatmul.mubr.f32.gmra.mrb[0].mxu0 %v1309
      %v1475 = vpop.f32.mrb[0].mxu0
      %v1476 = vadd.f32 %v1303, %v1475
      %v1477 = vpop.f32.mrb[0].mxu0
      %1478 = vmatprep.mubr.f32.mxu0 0.0
      %1479 = vmatmul.mubr.f32.gmra.mrb[0].mxu0 %v1312
      %v1480 = vpop.f32.mrb[0].mxu0
      %v1481 = vadd.f32 %v1303, %v1480
      %v1482 = vpop.f32.mrb[0].mxu0
      %1483 = vmatprep.mubr.f32.mxu0 0.0
      %1484 = vmatmul.mubr.f32.gmra.mrb[0].mxu0 %v1315
      %v1485 = vpop.f32.mrb[0].mxu0
      %v1486 = vadd.f32 %v1303, %v1485
      %v1487 = vpop.f32.mrb[0].mxu0
      %1488 = vmatprep.mubr.f32.mxu0 0.0
      %1489 = vmatmul.mubr.f32.gmra.mrb[0].mxu0 %v1318
      %v1490 = vpop.f32.mrb[0].mxu0
      %v1491 = vadd.f32 %v1303, %v1490
      %v1492 = vpop.f32.mrb[0].mxu0
      %1493 = vmatprep.mubr.f32.mxu0 0.0
      %1494 = vmatmul.mubr.f32.gmra.mrb[0].mxu0 %v1321
      %v1495 = vpop.f32.mrb[0].mxu0
      %v1496 = vadd.f32 %v1303, %v1495
      %v1497 = vpop.f32.mrb[0].mxu0
      %1498 = vmatprep.mubr.f32.mxu0 0.0
      %1499 = vmatmul.mubr.f32.gmra.mrb[0].mxu0 %v1324
      %v1500 = vpop.f32.mrb[0].mxu0
      %v1501 = vadd.f32 %v1303, %v1500
      %v1502 = vpop.f32.mrb[0].mxu0
      %1503 = vmatprep.mubr.f32.mxu0 0.0
      %1504 = vmatmul.mubr.f32.gmra.mrb[0].mxu0 %v1327
      %v1505 = vpop.f32.mrb[0].mxu0
      %v1506 = vadd.f32 %v1303, %v1505
      %v1507 = vpop.f32.mrb[0].mxu0
      %1508 = vmatprep.mubr.f32.mxu0 0.0
      %1509 = vmatmul.mubr.f32.gmra.mrb[0].mxu0 %v1330
      %v1510 = vpop.f32.mrb[0].mxu0
      %v1511 = vadd.f32 %v1303, %v1510
      %v1512 = vpop.f32.mrb[0].mxu0
      %1513 = vmatprep.mubr.f32.mxu0 0.0
      %1514 = vmatmul.mubr.f32.gmra.mrb[0].mxu0 %v1333
      %v1515 = vpop.f32.mrb[0].mxu0
      %v1516 = vadd.f32 %v1303, %v1515
      %v1517 = vpop.f32.mrb[0].mxu0
      %1518 = vmatprep.mubr.f32.mxu0 0.0
      %1519 = vmatmul.mubr.f32.gmra.mrb[0].mxu0 %v1336
      %v1520 = vpop.f32.mrb[0].mxu0
      %v1521 = vadd.f32 %v1303, %v1520
      %v1522 = vpop.f32.mrb[0].mxu0
      %1523 = vmatprep.mubr.f32.mxu0 0.0
      %1524 = vmatmul.mubr.f32.gmra.mrb[0].mxu0 %v1339
      %v1525 = vpop.f32.mrb[0].mxu0
      %v1526 = vadd.f32 %v1303, %v1525
      %v1527 = vpop.f32.mrb[0].mxu0
      %1528 = vmatprep.mubr.f32.mxu0 0.0
      %1529 = vmatmul.mubr.f32.gmra.mrb[0].mxu0 %v1342
      %v1530 = vpop.f32.mrb[0].mxu0
      %v1531 = vadd.f32 %v1303, %v1530
      %v1532 = vpop.f32.mrb[0].mxu0
      %1533 = vmatprep.mubr.f32.mxu0 0.0
      %1534 = vmatmul.mubr.f32.gmra.mrb[0].mxu0 %v1345
      %v1535 = vpop.f32.mrb[0].mxu0
      %v1536 = vadd.f32 %v1303, %v1535
      %v1537 = vpop.f32.mrb[0].mxu0
      %1538 = vmatprep.mubr.f32.mxu0 0.0
      %1539 = vmatmul.mubr.f32.gmra.mrb[0].mxu0 %v1348
      %v1540 = vpop.f32.mrb[0].mxu0
      %v1541 = vadd.f32 %v1303, %v1540
      %v1542 = vpop.f32.mrb[0].mxu0
      %1543 = vmatprep.mubr.f32.mxu0 0.0
      %1544 = vmatmul.mubr.f32.gmra.mrb[0].mxu0 %v1351
      %v1545 = vpop.f32.mrb[0].mxu0
      %v1546 = vadd.f32 %v1303, %v1545
      %v1547 = vpop.f32.mrb[0].mxu0
      %1548 = vmatprep.mubr.f32.mxu0 0.0
      %1549 = vmatmul.mubr.f32.gmra.mrb[0].mxu0 %v1354
      %v1550 = vpop.f32.mrb[0].mxu0
      %v1551 = vadd.f32 %v1303, %v1550
      %v1552 = vpop.f32.mrb[0].mxu0
      %1553 = vmatprep.mubr.f32.mxu0 0.0
      %1554 = vmatmul.mubr.f32.gmra.mrb[0].mxu0 %v1357
      %v1555 = vpop.f32.mrb[0].mxu0
      %v1556 = vadd.f32 %v1303, %v1555
      %v1557 = vpop.f32.mrb[0].mxu0
      %1558 = vmatprep.mubr.f32.mxu0 0.0
      %1559 = vmatmul.mubr.f32.gmra.mrb[0].mxu0 %v1360
      %v1560 = vpop.f32.mrb[0].mxu0
      %v1561 = vadd.f32 %v1303, %v1560
      %v1562 = vpop.f32.mrb[0].mxu0
      %1563 = vmatprep.mubr.f32.mxu0 0.0
      %1564 = vmatmul.mubr.f32.gmra.mrb[0].mxu0 %v1363
      %v1565 = vpop.f32.mrb[0].mxu0
      %v1566 = vadd.f32 %v1303, %v1565
      %v1567 = vpop.f32.mrb[0].mxu0
      %1568 = vmatprep.mubr.f32.mxu0 0.0
      %1569 = vmatmul.mubr.f32.gmra.mrb[0].mxu0 %v1366
      %v1570 = vpop.f32.mrb[0].mxu0
      %v1571 = vadd.f32 %v1303, %v1570
      %v1572 = vpop.f32.mrb[0].mxu0
      %1573 = vmatprep.mubr.f32.mxu0 0.0
      %1574 = vmatmul.mubr.f32.gmra.mrb[0].mxu0 %v1369
      %v1575 = vpop.f32.mrb[0].mxu0
      %v1576 = vadd.f32 %v1303, %v1575
      %v1577 = vpop.f32.mrb[0].mxu0
      %1578 = vmatprep.mubr.f32.mxu0 0.0
      %1579 = vmatmul.mubr.f32.gmra.mrb[0].mxu0 %v1372
      %v1580 = vpop.f32.mrb[0].mxu0
      %v1581 = vadd.f32 %v1303, %v1580
      %v1582 = vpop.f32.mrb[0].mxu0
      %1583 = vmatprep.mubr.f32.mxu0 0.0
      %1584 = vmatmul.mubr.f32.gmra.mrb[0].mxu0 %v1375
      %v1585 = vpop.f32.mrb[0].mxu0
      %v1586 = vadd.f32 %v1303, %v1585
      %v1587 = vpop.f32.mrb[0].mxu0
      %1588 = vmatprep.mubr.f32.mxu0 0.0
      %1589 = vmatmul.mubr.f32.gmra.mrb[0].mxu0 %v1378
      %v1590 = vpop.f32.mrb[0].mxu0
      %v1591 = vadd.f32 %v1303, %v1590
      %v1592 = vpop.f32.mrb[0].mxu0
      %1593 = vmatprep.mubr.f32.mxu0 0.0
      %1594 = vmatmul.mubr.f32.gmra.mrb[0].mxu0 %v1381
      %v1595 = vpop.f32.mrb[0].mxu0
      %v1596 = vadd.f32 %v1303, %v1595
      %v1597 = vpop.f32.mrb[0].mxu0
      %1598 = vmatprep.mubr.f32.mxu0 0.0
      %1599 = vmatmul.mubr.f32.gmra.mrb[0].mxu0 %v1384
      %v1600 = vpop.f32.mrb[0].mxu0
      %v1601 = vadd.f32 %v1303, %v1600
      %v1602 = vpop.f32.mrb[0].mxu0
      %1603 = vmatprep.mubr.f32.mxu0 0.0
      %1604 = vmatmul.mubr.f32.gmra.mrb[0].mxu0 %v1387
      %v1605 = vpop.f32.mrb[0].mxu0
      %v1606 = vadd.f32 %v1303, %v1605
      %v1607 = vpop.f32.mrb[0].mxu0
      %1608 = vmatprep.mubr.f32.mxu0 0.0
      %1609 = vmatmul.mubr.f32.gmra.mrb[0].mxu0 %v1390
      %v1610 = vpop.f32.mrb[0].mxu0
      %v1611 = vadd.f32 %v1303, %v1610
      %v1612 = vpop.f32.mrb[0].mxu0
      %1613 = vmatprep.mubr.f32.mxu0 0.0
      %1614 = vmatmul.mubr.f32.gmra.mrb[0].mxu0 %v1393
      %v1615 = vpop.f32.mrb[0].mxu0
      %v1616 = vadd.f32 %v1303, %v1615
      %v1617 = vpop.f32.mrb[0].mxu0
      %1618 = vmatprep.mubr.f32.mxu0 0.0
      %1619 = vmatmul.mubr.f32.gmra.mrb[0].mxu0 %v1396
      %v1620 = vpop.f32.mrb[0].mxu0
      %v1621 = vadd.f32 %v1303, %v1620
      %v1622 = vpop.f32.mrb[0].mxu0
      %1623 = vmatprep.mubr.f32.mxu0 0.0
      %1624 = vmatmul.mubr.f32.gmra.mrb[0].mxu0 %v1399
      %v1625 = vpop.f32.mrb[0].mxu0
      %v1626 = vadd.f32 %v1303, %v1625
      %v1627 = vpop.f32.mrb[0].mxu0
      %1628 = vdwg.mxu0
      %v1629 = vmax.f32 %v1471, 0.0
      %v1630 = vmax.f32 %v1476, 0.0
      %v1631 = vmax.f32 %v1481, 0.0
      %v1632 = vmax.f32 %v1486, 0.0
      %v1633 = vmax.f32 %v1491, 0.0
      %v1634 = vmax.f32 %v1496, 0.0
      %v1635 = vmax.f32 %v1501, 0.0
      %v1636 = vmax.f32 %v1506, 0.0
      %v1637 = vmax.f32 %v1511, 0.0
      %v1638 = vmax.f32 %v1516, 0.0
      %v1639 = vmax.f32 %v1521, 0.0
      %v1640 = vmax.f32 %v1526, 0.0
      %v1641 = vmax.f32 %v1531, 0.0
      %v1642 = vmax.f32 %v1536, 0.0
      %v1643 = vmax.f32 %v1541, 0.0
      %v1644 = vmax.f32 %v1546, 0.0
      %v1645 = vmax.f32 %v1551, 0.0
      %v1646 = vmax.f32 %v1556, 0.0
      %v1647 = vmax.f32 %v1561, 0.0
      %v1648 = vmax.f32 %v1566, 0.0
      %v1649 = vmax.f32 %v1571, 0.0
      %v1650 = vmax.f32 %v1576, 0.0
      %v1651 = vmax.f32 %v1581, 0.0
      %v1652 = vmax.f32 %v1586, 0.0
      %v1653 = vmax.f32 %v1591, 0.0
      %v1654 = vmax.f32 %v1596, 0.0
      %v1655 = vmax.f32 %v1601, 0.0
      %v1656 = vmax.f32 %v1606, 0.0
      %v1657 = vmax.f32 %v1611, 0.0
      %v1658 = vmax.f32 %v1616, 0.0
      %v1659 = vmax.f32 %v1621, 0.0
      %v1660 = vmax.f32 %v1626, 0.0
      %v1661 = vld [vmem:[%s8] sm:$0xff]
      %v1662 = vld [vmem:[%s8 + $0x8] sm:$0xff]
      %v1663 = vld [vmem:[%s8 + $0x10] sm:$0xff]
      %v1664 = vld [vmem:[%s8 + $0x18] sm:$0xff]
      %v1665 = vld [vmem:[%s9] sm:$0x1]
      %v1667 = vlaneseq
      %v1668 = vshrl.u32 %v1667, 7
      %v1669 = vsub.s32 0, %v1668
      %v1670 = vrot.slane %v1665, %v1669
      %v1673 = vsel %vm975, %v1629, 0
      %v1676 = vsel %vm975, %v1630, 0
      %v1679 = vsel %vm975, %v1631, 0
      %v1682 = vsel %vm975, %v1632, 0
      %v1685 = vsel %vm975, %v1633, 0
      %v1688 = vsel %vm975, %v1634, 0
      %v1691 = vsel %vm975, %v1635, 0
      %v1694 = vsel %vm975, %v1636, 0
      %v1697 = vsel %vm975, %v1637, 0
      %v1700 = vsel %vm975, %v1638, 0
      %v1703 = vsel %vm975, %v1639, 0
      %v1706 = vsel %vm975, %v1640, 0
      %v1709 = vsel %vm975, %v1641, 0
      %v1712 = vsel %vm975, %v1642, 0
      %v1715 = vsel %vm975, %v1643, 0
      %v1718 = vsel %vm975, %v1644, 0
      %v1721 = vsel %vm975, %v1645, 0
      %v1724 = vsel %vm975, %v1646, 0
      %v1727 = vsel %vm975, %v1647, 0
      %v1730 = vsel %vm975, %v1648, 0
      %v1733 = vsel %vm975, %v1649, 0
      %v1736 = vsel %vm975, %v1650, 0
      %v1739 = vsel %vm975, %v1651, 0
      %v1742 = vsel %vm975, %v1652, 0
      %v1745 = vsel %vm975, %v1653, 0
      %v1748 = vsel %vm975, %v1654, 0
      %v1751 = vsel %vm975, %v1655, 0
      %v1754 = vsel %vm975, %v1656, 0
      %v1757 = vsel %vm975, %v1657, 0
      %v1760 = vsel %vm975, %v1658, 0
      %v1763 = vsel %vm975, %v1659, 0
      %v1766 = vsel %vm975, %v1660, 0
      %1768 = vmatprep.subr.mxu0 0.0
      %1769 = vmatpush1.msra.mxu0 %v1661
      %1770 = vmatprep.subr.mxu0 0.0
      %1771 = vmatpush1.msra.mxu0 %v1662
      %1772 = vmatprep.subr.mxu0 0.0
      %1773 = vmatpush1.msra.mxu0 %v1663
      %1774 = vmatprep.subr.mxu0 0.0
      %1775 = vmatpush1.msra.mxu0 %v1664
      %1776 = vmatprep.subr.mxu0 0.0
      %1777 = vmatpush1.msra.mxu0 0.0
      %1778 = vmatprep.subr.mxu0 0.0
      %1779 = vmatpush1.msra.mxu0 0.0
      %1780 = vmatprep.subr.mxu0 0.0
      %1781 = vmatpush1.msra.mxu0 0.0
      %1782 = vmatprep.subr.mxu0 0.0
      %1783 = vmatpush1.msra.mxu0 0.0
      %1784 = vmatprep.subr.mxu0 0.0
      %1785 = vmatpush1.msra.mxu0 0.0
      %1786 = vmatprep.subr.mxu0 0.0
      %1787 = vmatpush1.msra.mxu0 0.0
      %1788 = vmatprep.subr.mxu0 0.0
      %1789 = vmatpush1.msra.mxu0 0.0
      %1790 = vmatprep.subr.mxu0 0.0
      %1791 = vmatpush1.msra.mxu0 0.0
      %1792 = vmatprep.subr.mxu0 0.0
      %1793 = vmatpush1.msra.mxu0 0.0
      %1794 = vmatprep.subr.mxu0 0.0
      %1795 = vmatpush1.msra.mxu0 0.0
      %1796 = vmatprep.subr.mxu0 0.0
      %1797 = vmatpush1.msra.mxu0 0.0
      %1798 = vmatprep.subr.mxu0 0.0
      %1799 = vmatpush1.msra.mxu0 0.0
      %1800 = vmatprep.subr.mxu0 0.0
      %1801 = vmatpush1.msra.mxu0 0.0
      %1802 = vmatprep.subr.mxu0 0.0
      %1803 = vmatpush1.msra.mxu0 0.0
      %1804 = vmatprep.subr.mxu0 0.0
      %1805 = vmatpush1.msra.mxu0 0.0
      %1806 = vmatprep.subr.mxu0 0.0
      %1807 = vmatpush1.msra.mxu0 0.0
      %1808 = vmatprep.subr.mxu0 0.0
      %1809 = vmatpush1.msra.mxu0 0.0
      %1810 = vmatprep.subr.mxu0 0.0
      %1811 = vmatpush1.msra.mxu0 0.0
      %1812 = vmatprep.subr.mxu0 0.0
      %1813 = vmatpush1.msra.mxu0 0.0
      %1814 = vmatprep.subr.mxu0 0.0
      %1815 = vmatpush1.msra.mxu0 0.0
      %1816 = vmatprep.subr.mxu0 0.0
      %1817 = vmatpush1.msra.mxu0 0.0
      %1818 = vmatprep.subr.mxu0 0.0
      %1819 = vmatpush1.msra.mxu0 0.0
      %1820 = vmatprep.subr.mxu0 0.0
      %1821 = vmatpush1.msra.mxu0 0.0
      %1822 = vmatprep.subr.mxu0 0.0
      %1823 = vmatpush1.msra.mxu0 0.0
      %1824 = vmatprep.subr.mxu0 0.0
      %1825 = vmatpush1.msra.mxu0 0.0
      %1826 = vmatprep.subr.mxu0 0.0
      %1827 = vmatpush1.msra.mxu0 0.0
      %1828 = vmatprep.subr.mxu0 0.0
      %1829 = vmatpush1.msra.mxu0 0.0
      %1830 = vmatprep.subr.mxu0 0.0
      %1831 = vmatpush1.msra.mxu0 0.0
      %1832 = vmatprep.mubr.f32.mxu0 0.0
      %1833 = vmatmul.mubr.f32.gmra.mrb[0].mxu0 %v1673
      %v1834 = vpop.f32.mrb[0].mxu0
      %v1835 = vadd.f32 %v1670, %v1834
      %v1836 = vpop.f32.mrb[0].mxu0
      %1837 = vmatprep.mubr.f32.mxu0 0.0
      %1838 = vmatmul.mubr.f32.gmra.mrb[0].mxu0 %v1676
      %v1839 = vpop.f32.mrb[0].mxu0
      %v1840 = vadd.f32 %v1670, %v1839
      %v1841 = vpop.f32.mrb[0].mxu0
      %1842 = vmatprep.mubr.f32.mxu0 0.0
      %1843 = vmatmul.mubr.f32.gmra.mrb[0].mxu0 %v1679
      %v1844 = vpop.f32.mrb[0].mxu0
      %v1845 = vadd.f32 %v1670, %v1844
      %v1846 = vpop.f32.mrb[0].mxu0
      %1847 = vmatprep.mubr.f32.mxu0 0.0
      %1848 = vmatmul.mubr.f32.gmra.mrb[0].mxu0 %v1682
      %v1849 = vpop.f32.mrb[0].mxu0
      %v1850 = vadd.f32 %v1670, %v1849
      %v1851 = vpop.f32.mrb[0].mxu0
      %1852 = vmatprep.mubr.f32.mxu0 0.0
      %1853 = vmatmul.mubr.f32.gmra.mrb[0].mxu0 %v1685
      %v1854 = vpop.f32.mrb[0].mxu0
      %v1855 = vadd.f32 %v1670, %v1854
      %v1856 = vpop.f32.mrb[0].mxu0
      %1857 = vmatprep.mubr.f32.mxu0 0.0
      %1858 = vmatmul.mubr.f32.gmra.mrb[0].mxu0 %v1688
      %v1859 = vpop.f32.mrb[0].mxu0
      %v1860 = vadd.f32 %v1670, %v1859
      %v1861 = vpop.f32.mrb[0].mxu0
      %1862 = vmatprep.mubr.f32.mxu0 0.0
      %1863 = vmatmul.mubr.f32.gmra.mrb[0].mxu0 %v1691
      %v1864 = vpop.f32.mrb[0].mxu0
      %v1865 = vadd.f32 %v1670, %v1864
      %v1866 = vpop.f32.mrb[0].mxu0
      %1867 = vmatprep.mubr.f32.mxu0 0.0
      %1868 = vmatmul.mubr.f32.gmra.mrb[0].mxu0 %v1694
      %v1869 = vpop.f32.mrb[0].mxu0
      %v1870 = vadd.f32 %v1670, %v1869
      %v1871 = vpop.f32.mrb[0].mxu0
      %1872 = vmatprep.mubr.f32.mxu0 0.0
      %1873 = vmatmul.mubr.f32.gmra.mrb[0].mxu0 %v1697
      %v1874 = vpop.f32.mrb[0].mxu0
      %v1875 = vadd.f32 %v1670, %v1874
      %v1876 = vpop.f32.mrb[0].mxu0
      %1877 = vmatprep.mubr.f32.mxu0 0.0
      %1878 = vmatmul.mubr.f32.gmra.mrb[0].mxu0 %v1700
      %v1879 = vpop.f32.mrb[0].mxu0
      %v1880 = vadd.f32 %v1670, %v1879
      %v1881 = vpop.f32.mrb[0].mxu0
      %1882 = vmatprep.mubr.f32.mxu0 0.0
      %1883 = vmatmul.mubr.f32.gmra.mrb[0].mxu0 %v1703
      %v1884 = vpop.f32.mrb[0].mxu0
      %v1885 = vadd.f32 %v1670, %v1884
      %v1886 = vpop.f32.mrb[0].mxu0
      %1887 = vmatprep.mubr.f32.mxu0 0.0
      %1888 = vmatmul.mubr.f32.gmra.mrb[0].mxu0 %v1706
      %v1889 = vpop.f32.mrb[0].mxu0
      %v1890 = vadd.f32 %v1670, %v1889
      %v1891 = vpop.f32.mrb[0].mxu0
      %1892 = vmatprep.mubr.f32.mxu0 0.0
      %1893 = vmatmul.mubr.f32.gmra.mrb[0].mxu0 %v1709
      %v1894 = vpop.f32.mrb[0].mxu0
      %v1895 = vadd.f32 %v1670, %v1894
      %v1896 = vpop.f32.mrb[0].mxu0
      %1897 = vmatprep.mubr.f32.mxu0 0.0
      %1898 = vmatmul.mubr.f32.gmra.mrb[0].mxu0 %v1712
      %v1899 = vpop.f32.mrb[0].mxu0
      %v1900 = vadd.f32 %v1670, %v1899
      %v1901 = vpop.f32.mrb[0].mxu0
      %1902 = vmatprep.mubr.f32.mxu0 0.0
      %1903 = vmatmul.mubr.f32.gmra.mrb[0].mxu0 %v1715
      %v1904 = vpop.f32.mrb[0].mxu0
      %v1905 = vadd.f32 %v1670, %v1904
      %v1906 = vpop.f32.mrb[0].mxu0
      %1907 = vmatprep.mubr.f32.mxu0 0.0
      %1908 = vmatmul.mubr.f32.gmra.mrb[0].mxu0 %v1718
      %v1909 = vpop.f32.mrb[0].mxu0
      %v1910 = vadd.f32 %v1670, %v1909
      %v1911 = vpop.f32.mrb[0].mxu0
      %1912 = vmatprep.mubr.f32.mxu0 0.0
      %1913 = vmatmul.mubr.f32.gmra.mrb[0].mxu0 %v1721
      %v1914 = vpop.f32.mrb[0].mxu0
      %v1915 = vadd.f32 %v1670, %v1914
      %v1916 = vpop.f32.mrb[0].mxu0
      %1917 = vmatprep.mubr.f32.mxu0 0.0
      %1918 = vmatmul.mubr.f32.gmra.mrb[0].mxu0 %v1724
      %v1919 = vpop.f32.mrb[0].mxu0
      %v1920 = vadd.f32 %v1670, %v1919
      %v1921 = vpop.f32.mrb[0].mxu0
      %1922 = vmatprep.mubr.f32.mxu0 0.0
      %1923 = vmatmul.mubr.f32.gmra.mrb[0].mxu0 %v1727
      %v1924 = vpop.f32.mrb[0].mxu0
      %v1925 = vadd.f32 %v1670, %v1924
      %v1926 = vpop.f32.mrb[0].mxu0
      %1927 = vmatprep.mubr.f32.mxu0 0.0
      %1928 = vmatmul.mubr.f32.gmra.mrb[0].mxu0 %v1730
      %v1929 = vpop.f32.mrb[0].mxu0
      %v1930 = vadd.f32 %v1670, %v1929
      %v1931 = vpop.f32.mrb[0].mxu0
      %1932 = vmatprep.mubr.f32.mxu0 0.0
      %1933 = vmatmul.mubr.f32.gmra.mrb[0].mxu0 %v1733
      %v1934 = vpop.f32.mrb[0].mxu0
      %v1935 = vadd.f32 %v1670, %v1934
      %v1936 = vpop.f32.mrb[0].mxu0
      %1937 = vmatprep.mubr.f32.mxu0 0.0
      %1938 = vmatmul.mubr.f32.gmra.mrb[0].mxu0 %v1736
      %v1939 = vpop.f32.mrb[0].mxu0
      %v1940 = vadd.f32 %v1670, %v1939
      %v1941 = vpop.f32.mrb[0].mxu0
      %1942 = vmatprep.mubr.f32.mxu0 0.0
      %1943 = vmatmul.mubr.f32.gmra.mrb[0].mxu0 %v1739
      %v1944 = vpop.f32.mrb[0].mxu0
      %v1945 = vadd.f32 %v1670, %v1944
      %v1946 = vpop.f32.mrb[0].mxu0
      %1947 = vmatprep.mubr.f32.mxu0 0.0
      %1948 = vmatmul.mubr.f32.gmra.mrb[0].mxu0 %v1742
      %v1949 = vpop.f32.mrb[0].mxu0
      %v1950 = vadd.f32 %v1670, %v1949
      %v1951 = vpop.f32.mrb[0].mxu0
      %1952 = vmatprep.mubr.f32.mxu0 0.0
      %1953 = vmatmul.mubr.f32.gmra.mrb[0].mxu0 %v1745
      %v1954 = vpop.f32.mrb[0].mxu0
      %v1955 = vadd.f32 %v1670, %v1954
      %v1956 = vpop.f32.mrb[0].mxu0
      %1957 = vmatprep.mubr.f32.mxu0 0.0
      %1958 = vmatmul.mubr.f32.gmra.mrb[0].mxu0 %v1748
      %v1959 = vpop.f32.mrb[0].mxu0
      %v1960 = vadd.f32 %v1670, %v1959
      %v1961 = vpop.f32.mrb[0].mxu0
      %1962 = vmatprep.mubr.f32.mxu0 0.0
      %1963 = vmatmul.mubr.f32.gmra.mrb[0].mxu0 %v1751
      %v1964 = vpop.f32.mrb[0].mxu0
      %v1965 = vadd.f32 %v1670, %v1964
      %v1966 = vpop.f32.mrb[0].mxu0
      %1967 = vmatprep.mubr.f32.mxu0 0.0
      %1968 = vmatmul.mubr.f32.gmra.mrb[0].mxu0 %v1754
      %v1969 = vpop.f32.mrb[0].mxu0
      %v1970 = vadd.f32 %v1670, %v1969
      %v1971 = vpop.f32.mrb[0].mxu0
      %1972 = vmatprep.mubr.f32.mxu0 0.0
      %1973 = vmatmul.mubr.f32.gmra.mrb[0].mxu0 %v1757
      %v1974 = vpop.f32.mrb[0].mxu0
      %v1975 = vadd.f32 %v1670, %v1974
      %v1976 = vpop.f32.mrb[0].mxu0
      %1977 = vmatprep.mubr.f32.mxu0 0.0
      %1978 = vmatmul.mubr.f32.gmra.mrb[0].mxu0 %v1760
      %v1979 = vpop.f32.mrb[0].mxu0
      %v1980 = vadd.f32 %v1670, %v1979
      %v1981 = vpop.f32.mrb[0].mxu0
      %1982 = vmatprep.mubr.f32.mxu0 0.0
      %1983 = vmatmul.mubr.f32.gmra.mrb[0].mxu0 %v1763
      %v1984 = vpop.f32.mrb[0].mxu0
      %v1985 = vadd.f32 %v1670, %v1984
      %v1986 = vpop.f32.mrb[0].mxu0
      %1987 = vmatprep.mubr.f32.mxu0 0.0
      %1988 = vmatmul.mubr.f32.gmra.mrb[0].mxu0 %v1766
      %v1989 = vpop.f32.mrb[0].mxu0
      %v1990 = vadd.f32 %v1670, %v1989
      %v1991 = vpop.f32.mrb[0].mxu0
      %1992 = vdwg.mxu0
      %v1993 = vadd.f32 %v1139, %v1835
      %v1994 = vadd.f32 %v1144, %v1840
      %v1995 = vadd.f32 %v1149, %v1845
      %v1996 = vadd.f32 %v1154, %v1850
      %v1997 = vadd.f32 %v1159, %v1855
      %v1998 = vadd.f32 %v1164, %v1860
      %v1999 = vadd.f32 %v1169, %v1865
      %v2000 = vadd.f32 %v1174, %v1870
      %v2001 = vadd.f32 %v1179, %v1875
      %v2002 = vadd.f32 %v1184, %v1880
      %v2003 = vadd.f32 %v1189, %v1885
      %v2004 = vadd.f32 %v1194, %v1890
      %v2005 = vadd.f32 %v1199, %v1895
      %v2006 = vadd.f32 %v1204, %v1900
      %v2007 = vadd.f32 %v1209, %v1905
      %v2008 = vadd.f32 %v1214, %v1910
      %v2009 = vadd.f32 %v1219, %v1915
      %v2010 = vadd.f32 %v1224, %v1920
      %v2011 = vadd.f32 %v1229, %v1925
      %v2012 = vadd.f32 %v1234, %v1930
      %v2013 = vadd.f32 %v1239, %v1935
      %v2014 = vadd.f32 %v1244, %v1940
      %v2015 = vadd.f32 %v1249, %v1945
      %v2016 = vadd.f32 %v1254, %v1950
      %v2017 = vadd.f32 %v1259, %v1955
      %v2018 = vadd.f32 %v1264, %v1960
      %v2019 = vadd.f32 %v1269, %v1965
      %v2020 = vadd.f32 %v1274, %v1970
      %v2021 = vadd.f32 %v1279, %v1975
      %v2022 = vadd.f32 %v1284, %v1980
      %v2023 = vadd.f32 %v1289, %v1985
      %v2024 = vadd.f32 %v1294, %v1990
      %v2025 = vmax.f32 %v1993, 0.0
      %v2026 = vmax.f32 %v1994, 0.0
      %v2027 = vmax.f32 %v1995, 0.0
      %v2028 = vmax.f32 %v1996, 0.0
      %v2029 = vmax.f32 %v1997, 0.0
      %v2030 = vmax.f32 %v1998, 0.0
      %v2031 = vmax.f32 %v1999, 0.0
      %v2032 = vmax.f32 %v2000, 0.0
      %v2033 = vmax.f32 %v2001, 0.0
      %v2034 = vmax.f32 %v2002, 0.0
      %v2035 = vmax.f32 %v2003, 0.0
      %v2036 = vmax.f32 %v2004, 0.0
      %v2037 = vmax.f32 %v2005, 0.0
      %v2038 = vmax.f32 %v2006, 0.0
      %v2039 = vmax.f32 %v2007, 0.0
      %v2040 = vmax.f32 %v2008, 0.0
      %v2041 = vmax.f32 %v2009, 0.0
      %v2042 = vmax.f32 %v2010, 0.0
      %v2043 = vmax.f32 %v2011, 0.0
      %v2044 = vmax.f32 %v2012, 0.0
      %v2045 = vmax.f32 %v2013, 0.0
      %v2046 = vmax.f32 %v2014, 0.0
      %v2047 = vmax.f32 %v2015, 0.0
      %v2048 = vmax.f32 %v2016, 0.0
      %v2049 = vmax.f32 %v2017, 0.0
      %v2050 = vmax.f32 %v2018, 0.0
      %v2051 = vmax.f32 %v2019, 0.0
      %v2052 = vmax.f32 %v2020, 0.0
      %v2053 = vmax.f32 %v2021, 0.0
      %v2054 = vmax.f32 %v2022, 0.0
      %v2055 = vmax.f32 %v2023, 0.0
      %v2056 = vmax.f32 %v2024, 0.0
      %v2057 = vld [vmem:[%s10] sm:$0xff]
      %v2058 = vld [vmem:[%s10 + $0x8] sm:$0xff]
      %v2059 = vld [vmem:[%s10 + $0x10] sm:$0xff]
      %v2060 = vld [vmem:[%s10 + $0x18] sm:$0xff]
      %v2061 = vld [vmem:[%s11] sm:$0x1]
      %v2063 = vlaneseq
      %v2064 = vshrl.u32 %v2063, 7
      %v2065 = vsub.s32 0, %v2064
      %v2066 = vrot.slane %v2061, %v2065
      %v2069 = vsel %vm975, %v2025, 0
      %v2072 = vsel %vm975, %v2026, 0
      %v2075 = vsel %vm975, %v2027, 0
      %v2078 = vsel %vm975, %v2028, 0
      %v2081 = vsel %vm975, %v2029, 0
      %v2084 = vsel %vm975, %v2030, 0
      %v2087 = vsel %vm975, %v2031, 0
      %v2090 = vsel %vm975, %v2032, 0
      %v2093 = vsel %vm975, %v2033, 0
      %v2096 = vsel %vm975, %v2034, 0
      %v2099 = vsel %vm975, %v2035, 0
      %v2102 = vsel %vm975, %v2036, 0
      %v2105 = vsel %vm975, %v2037, 0
      %v2108 = vsel %vm975, %v2038, 0
      %v2111 = vsel %vm975, %v2039, 0
      %v2114 = vsel %vm975, %v2040, 0
      %v2117 = vsel %vm975, %v2041, 0
      %v2120 = vsel %vm975, %v2042, 0
      %v2123 = vsel %vm975, %v2043, 0
      %v2126 = vsel %vm975, %v2044, 0
      %v2129 = vsel %vm975, %v2045, 0
      %v2132 = vsel %vm975, %v2046, 0
      %v2135 = vsel %vm975, %v2047, 0
      %v2138 = vsel %vm975, %v2048, 0
      %v2141 = vsel %vm975, %v2049, 0
      %v2144 = vsel %vm975, %v2050, 0
      %v2147 = vsel %vm975, %v2051, 0
      %v2150 = vsel %vm975, %v2052, 0
      %v2153 = vsel %vm975, %v2053, 0
      %v2156 = vsel %vm975, %v2054, 0
      %v2159 = vsel %vm975, %v2055, 0
      %v2162 = vsel %vm975, %v2056, 0
      %2164 = vmatprep.subr.mxu0 0.0
      %2165 = vmatpush1.msra.mxu0 %v2057
      %2166 = vmatprep.subr.mxu0 0.0
      %2167 = vmatpush1.msra.mxu0 %v2058
      %2168 = vmatprep.subr.mxu0 0.0
      %2169 = vmatpush1.msra.mxu0 %v2059
      %2170 = vmatprep.subr.mxu0 0.0
      %2171 = vmatpush1.msra.mxu0 %v2060
      %2172 = vmatprep.subr.mxu0 0.0
      %2173 = vmatpush1.msra.mxu0 0.0
      %2174 = vmatprep.subr.mxu0 0.0
      %2175 = vmatpush1.msra.mxu0 0.0
      %2176 = vmatprep.subr.mxu0 0.0
      %2177 = vmatpush1.msra.mxu0 0.0
      %2178 = vmatprep.subr.mxu0 0.0
      %2179 = vmatpush1.msra.mxu0 0.0
      %2180 = vmatprep.subr.mxu0 0.0
      %2181 = vmatpush1.msra.mxu0 0.0
      %2182 = vmatprep.subr.mxu0 0.0
      %2183 = vmatpush1.msra.mxu0 0.0
      %2184 = vmatprep.subr.mxu0 0.0
      %2185 = vmatpush1.msra.mxu0 0.0
      %2186 = vmatprep.subr.mxu0 0.0
      %2187 = vmatpush1.msra.mxu0 0.0
      %2188 = vmatprep.subr.mxu0 0.0
      %2189 = vmatpush1.msra.mxu0 0.0
      %2190 = vmatprep.subr.mxu0 0.0
      %2191 = vmatpush1.msra.mxu0 0.0
      %2192 = vmatprep.subr.mxu0 0.0
      %2193 = vmatpush1.msra.mxu0 0.0
      %2194 = vmatprep.subr.mxu0 0.0
      %2195 = vmatpush1.msra.mxu0 0.0
      %2196 = vmatprep.subr.mxu0 0.0
      %2197 = vmatpush1.msra.mxu0 0.0
      %2198 = vmatprep.subr.mxu0 0.0
      %2199 = vmatpush1.msra.mxu0 0.0
      %2200 = vmatprep.subr.mxu0 0.0
      %2201 = vmatpush1.msra.mxu0 0.0
      %2202 = vmatprep.subr.mxu0 0.0
      %2203 = vmatpush1.msra.mxu0 0.0
      %2204 = vmatprep.subr.mxu0 0.0
      %2205 = vmatpush1.msra.mxu0 0.0
      %2206 = vmatprep.subr.mxu0 0.0
      %2207 = vmatpush1.msra.mxu0 0.0
      %2208 = vmatprep.subr.mxu0 0.0
      %2209 = vmatpush1.msra.mxu0 0.0
      %2210 = vmatprep.subr.mxu0 0.0
      %2211 = vmatpush1.msra.mxu0 0.0
      %2212 = vmatprep.subr.mxu0 0.0
      %2213 = vmatpush1.msra.mxu0 0.0
      %2214 = vmatprep.subr.mxu0 0.0
      %2215 = vmatpush1.msra.mxu0 0.0
      %2216 = vmatprep.subr.mxu0 0.0
      %2217 = vmatpush1.msra.mxu0 0.0
      %2218 = vmatprep.subr.mxu0 0.0
      %2219 = vmatpush1.msra.mxu0 0.0
      %2220 = vmatprep.subr.mxu0 0.0
      %2221 = vmatpush1.msra.mxu0 0.0
      %2222 = vmatprep.subr.mxu0 0.0
      %2223 = vmatpush1.msra.mxu0 0.0
      %2224 = vmatprep.subr.mxu0 0.0
      %2225 = vmatpush1.msra.mxu0 0.0
      %2226 = vmatprep.subr.mxu0 0.0
      %2227 = vmatpush1.msra.mxu0 0.0
      %2228 = vmatprep.mubr.f32.mxu0 0.0
      %2229 = vmatmul.mubr.f32.gmra.mrb[0].mxu0 %v2069
      %v2230 = vpop.f32.mrb[0].mxu0
      %v2231 = vadd.f32 %v2066, %v2230
      %v2232 = vpop.f32.mrb[0].mxu0
      %2233 = vmatprep.mubr.f32.mxu0 0.0
      %2234 = vmatmul.mubr.f32.gmra.mrb[0].mxu0 %v2072
      %v2235 = vpop.f32.mrb[0].mxu0
      %v2236 = vadd.f32 %v2066, %v2235
      %v2237 = vpop.f32.mrb[0].mxu0
      %2238 = vmatprep.mubr.f32.mxu0 0.0
      %2239 = vmatmul.mubr.f32.gmra.mrb[0].mxu0 %v2075
      %v2240 = vpop.f32.mrb[0].mxu0
      %v2241 = vadd.f32 %v2066, %v2240
      %v2242 = vpop.f32.mrb[0].mxu0
      %2243 = vmatprep.mubr.f32.mxu0 0.0
      %2244 = vmatmul.mubr.f32.gmra.mrb[0].mxu0 %v2078
      %v2245 = vpop.f32.mrb[0].mxu0
      %v2246 = vadd.f32 %v2066, %v2245
      %v2247 = vpop.f32.mrb[0].mxu0
      %2248 = vmatprep.mubr.f32.mxu0 0.0
      %2249 = vmatmul.mubr.f32.gmra.mrb[0].mxu0 %v2081
      %v2250 = vpop.f32.mrb[0].mxu0
      %v2251 = vadd.f32 %v2066, %v2250
      %v2252 = vpop.f32.mrb[0].mxu0
      %2253 = vmatprep.mubr.f32.mxu0 0.0
      %2254 = vmatmul.mubr.f32.gmra.mrb[0].mxu0 %v2084
      %v2255 = vpop.f32.mrb[0].mxu0
      %v2256 = vadd.f32 %v2066, %v2255
      %v2257 = vpop.f32.mrb[0].mxu0
      %2258 = vmatprep.mubr.f32.mxu0 0.0
      %2259 = vmatmul.mubr.f32.gmra.mrb[0].mxu0 %v2087
      %v2260 = vpop.f32.mrb[0].mxu0
      %v2261 = vadd.f32 %v2066, %v2260
      %v2262 = vpop.f32.mrb[0].mxu0
      %2263 = vmatprep.mubr.f32.mxu0 0.0
      %2264 = vmatmul.mubr.f32.gmra.mrb[0].mxu0 %v2090
      %v2265 = vpop.f32.mrb[0].mxu0
      %v2266 = vadd.f32 %v2066, %v2265
      %v2267 = vpop.f32.mrb[0].mxu0
      %2268 = vmatprep.mubr.f32.mxu0 0.0
      %2269 = vmatmul.mubr.f32.gmra.mrb[0].mxu0 %v2093
      %v2270 = vpop.f32.mrb[0].mxu0
      %v2271 = vadd.f32 %v2066, %v2270
      %v2272 = vpop.f32.mrb[0].mxu0
      %2273 = vmatprep.mubr.f32.mxu0 0.0
      %2274 = vmatmul.mubr.f32.gmra.mrb[0].mxu0 %v2096
      %v2275 = vpop.f32.mrb[0].mxu0
      %v2276 = vadd.f32 %v2066, %v2275
      %v2277 = vpop.f32.mrb[0].mxu0
      %2278 = vmatprep.mubr.f32.mxu0 0.0
      %2279 = vmatmul.mubr.f32.gmra.mrb[0].mxu0 %v2099
      %v2280 = vpop.f32.mrb[0].mxu0
      %v2281 = vadd.f32 %v2066, %v2280
      %v2282 = vpop.f32.mrb[0].mxu0
      %2283 = vmatprep.mubr.f32.mxu0 0.0
      %2284 = vmatmul.mubr.f32.gmra.mrb[0].mxu0 %v2102
      %v2285 = vpop.f32.mrb[0].mxu0
      %v2286 = vadd.f32 %v2066, %v2285
      %v2287 = vpop.f32.mrb[0].mxu0
      %2288 = vmatprep.mubr.f32.mxu0 0.0
      %2289 = vmatmul.mubr.f32.gmra.mrb[0].mxu0 %v2105
      %v2290 = vpop.f32.mrb[0].mxu0
      %v2291 = vadd.f32 %v2066, %v2290
      %v2292 = vpop.f32.mrb[0].mxu0
      %2293 = vmatprep.mubr.f32.mxu0 0.0
      %2294 = vmatmul.mubr.f32.gmra.mrb[0].mxu0 %v2108
      %v2295 = vpop.f32.mrb[0].mxu0
      %v2296 = vadd.f32 %v2066, %v2295
      %v2297 = vpop.f32.mrb[0].mxu0
      %2298 = vmatprep.mubr.f32.mxu0 0.0
      %2299 = vmatmul.mubr.f32.gmra.mrb[0].mxu0 %v2111
      %v2300 = vpop.f32.mrb[0].mxu0
      %v2301 = vadd.f32 %v2066, %v2300
      %v2302 = vpop.f32.mrb[0].mxu0
      %2303 = vmatprep.mubr.f32.mxu0 0.0
      %2304 = vmatmul.mubr.f32.gmra.mrb[0].mxu0 %v2114
      %v2305 = vpop.f32.mrb[0].mxu0
      %v2306 = vadd.f32 %v2066, %v2305
      %v2307 = vpop.f32.mrb[0].mxu0
      %2308 = vmatprep.mubr.f32.mxu0 0.0
      %2309 = vmatmul.mubr.f32.gmra.mrb[0].mxu0 %v2117
      %v2310 = vpop.f32.mrb[0].mxu0
      %v2311 = vadd.f32 %v2066, %v2310
      %v2312 = vpop.f32.mrb[0].mxu0
      %2313 = vmatprep.mubr.f32.mxu0 0.0
      %2314 = vmatmul.mubr.f32.gmra.mrb[0].mxu0 %v2120
      %v2315 = vpop.f32.mrb[0].mxu0
      %v2316 = vadd.f32 %v2066, %v2315
      %v2317 = vpop.f32.mrb[0].mxu0
      %2318 = vmatprep.mubr.f32.mxu0 0.0
      %2319 = vmatmul.mubr.f32.gmra.mrb[0].mxu0 %v2123
      %v2320 = vpop.f32.mrb[0].mxu0
      %v2321 = vadd.f32 %v2066, %v2320
      %v2322 = vpop.f32.mrb[0].mxu0
      %2323 = vmatprep.mubr.f32.mxu0 0.0
      %2324 = vmatmul.mubr.f32.gmra.mrb[0].mxu0 %v2126
      %v2325 = vpop.f32.mrb[0].mxu0
      %v2326 = vadd.f32 %v2066, %v2325
      %v2327 = vpop.f32.mrb[0].mxu0
      %2328 = vmatprep.mubr.f32.mxu0 0.0
      %2329 = vmatmul.mubr.f32.gmra.mrb[0].mxu0 %v2129
      %v2330 = vpop.f32.mrb[0].mxu0
      %v2331 = vadd.f32 %v2066, %v2330
      %v2332 = vpop.f32.mrb[0].mxu0
      %2333 = vmatprep.mubr.f32.mxu0 0.0
      %2334 = vmatmul.mubr.f32.gmra.mrb[0].mxu0 %v2132
      %v2335 = vpop.f32.mrb[0].mxu0
      %v2336 = vadd.f32 %v2066, %v2335
      %v2337 = vpop.f32.mrb[0].mxu0
      %2338 = vmatprep.mubr.f32.mxu0 0.0
      %2339 = vmatmul.mubr.f32.gmra.mrb[0].mxu0 %v2135
      %v2340 = vpop.f32.mrb[0].mxu0
      %v2341 = vadd.f32 %v2066, %v2340
      %v2342 = vpop.f32.mrb[0].mxu0
      %2343 = vmatprep.mubr.f32.mxu0 0.0
      %2344 = vmatmul.mubr.f32.gmra.mrb[0].mxu0 %v2138
      %v2345 = vpop.f32.mrb[0].mxu0
      %v2346 = vadd.f32 %v2066, %v2345
      %v2347 = vpop.f32.mrb[0].mxu0
      %2348 = vmatprep.mubr.f32.mxu0 0.0
      %2349 = vmatmul.mubr.f32.gmra.mrb[0].mxu0 %v2141
      %v2350 = vpop.f32.mrb[0].mxu0
      %v2351 = vadd.f32 %v2066, %v2350
      %v2352 = vpop.f32.mrb[0].mxu0
      %2353 = vmatprep.mubr.f32.mxu0 0.0
      %2354 = vmatmul.mubr.f32.gmra.mrb[0].mxu0 %v2144
      %v2355 = vpop.f32.mrb[0].mxu0
      %v2356 = vadd.f32 %v2066, %v2355
      %v2357 = vpop.f32.mrb[0].mxu0
      %2358 = vmatprep.mubr.f32.mxu0 0.0
      %2359 = vmatmul.mubr.f32.gmra.mrb[0].mxu0 %v2147
      %v2360 = vpop.f32.mrb[0].mxu0
      %v2361 = vadd.f32 %v2066, %v2360
      %v2362 = vpop.f32.mrb[0].mxu0
      %2363 = vmatprep.mubr.f32.mxu0 0.0
      %2364 = vmatmul.mubr.f32.gmra.mrb[0].mxu0 %v2150
      %v2365 = vpop.f32.mrb[0].mxu0
      %v2366 = vadd.f32 %v2066, %v2365
      %v2367 = vpop.f32.mrb[0].mxu0
      %2368 = vmatprep.mubr.f32.mxu0 0.0
      %2369 = vmatmul.mubr.f32.gmra.mrb[0].mxu0 %v2153
      %v2370 = vpop.f32.mrb[0].mxu0
      %v2371 = vadd.f32 %v2066, %v2370
      %v2372 = vpop.f32.mrb[0].mxu0
      %2373 = vmatprep.mubr.f32.mxu0 0.0
      %2374 = vmatmul.mubr.f32.gmra.mrb[0].mxu0 %v2156
      %v2375 = vpop.f32.mrb[0].mxu0
      %v2376 = vadd.f32 %v2066, %v2375
      %v2377 = vpop.f32.mrb[0].mxu0
      %2378 = vmatprep.mubr.f32.mxu0 0.0
      %2379 = vmatmul.mubr.f32.gmra.mrb[0].mxu0 %v2159
      %v2380 = vpop.f32.mrb[0].mxu0
      %v2381 = vadd.f32 %v2066, %v2380
      %v2382 = vpop.f32.mrb[0].mxu0
      %2383 = vmatprep.mubr.f32.mxu0 0.0
      %2384 = vmatmul.mubr.f32.gmra.mrb[0].mxu0 %v2162
      %v2385 = vpop.f32.mrb[0].mxu0
      %v2386 = vadd.f32 %v2066, %v2385
      %v2387 = vpop.f32.mrb[0].mxu0
      %2388 = vdwg.mxu0
      %v2389 = vmax.f32 %v2231, 0.0
      %v2390 = vmax.f32 %v2236, 0.0
      %v2391 = vmax.f32 %v2241, 0.0
      %v2392 = vmax.f32 %v2246, 0.0
      %v2393 = vmax.f32 %v2251, 0.0
      %v2394 = vmax.f32 %v2256, 0.0
      %v2395 = vmax.f32 %v2261, 0.0
      %v2396 = vmax.f32 %v2266, 0.0
      %v2397 = vmax.f32 %v2271, 0.0
      %v2398 = vmax.f32 %v2276, 0.0
      %v2399 = vmax.f32 %v2281, 0.0
      %v2400 = vmax.f32 %v2286, 0.0
      %v2401 = vmax.f32 %v2291, 0.0
      %v2402 = vmax.f32 %v2296, 0.0
      %v2403 = vmax.f32 %v2301, 0.0
      %v2404 = vmax.f32 %v2306, 0.0
      %v2405 = vmax.f32 %v2311, 0.0
      %v2406 = vmax.f32 %v2316, 0.0
      %v2407 = vmax.f32 %v2321, 0.0
      %v2408 = vmax.f32 %v2326, 0.0
      %v2409 = vmax.f32 %v2331, 0.0
      %v2410 = vmax.f32 %v2336, 0.0
      %v2411 = vmax.f32 %v2341, 0.0
      %v2412 = vmax.f32 %v2346, 0.0
      %v2413 = vmax.f32 %v2351, 0.0
      %v2414 = vmax.f32 %v2356, 0.0
      %v2415 = vmax.f32 %v2361, 0.0
      %v2416 = vmax.f32 %v2366, 0.0
      %v2417 = vmax.f32 %v2371, 0.0
      %v2418 = vmax.f32 %v2376, 0.0
      %v2419 = vmax.f32 %v2381, 0.0
      %v2420 = vmax.f32 %v2386, 0.0
      %2421 = vst.msk [vmem:[%s526] sm:$0xff] %vm975, %v2389
      %2422 = vst.msk [vmem:[%s526 + $0x8] sm:$0xff] %vm975, %v2390
      %2423 = vst.msk [vmem:[%s526 + $0x10] sm:$0xff] %vm975, %v2391
      %2424 = vst.msk [vmem:[%s526 + $0x18] sm:$0xff] %vm975, %v2392
      %2425 = vst.msk [vmem:[%s526 + $0x20] sm:$0xff] %vm975, %v2393
      %2426 = vst.msk [vmem:[%s526 + $0x28] sm:$0xff] %vm975, %v2394
      %2427 = vst.msk [vmem:[%s526 + $0x30] sm:$0xff] %vm975, %v2395
      %2428 = vst.msk [vmem:[%s526 + $0x38] sm:$0xff] %vm975, %v2396
      %2429 = vst.msk [vmem:[%s526 + $0x40] sm:$0xff] %vm975, %v2397
      %2430 = vst.msk [vmem:[%s526 + $0x48] sm:$0xff] %vm975, %v2398
      %2431 = vst.msk [vmem:[%s526 + $0x50] sm:$0xff] %vm975, %v2399
      %2432 = vst.msk [vmem:[%s526 + $0x58] sm:$0xff] %vm975, %v2400
      %2433 = vst.msk [vmem:[%s526 + $0x60] sm:$0xff] %vm975, %v2401
      %2434 = vst.msk [vmem:[%s526 + $0x68] sm:$0xff] %vm975, %v2402
      %2435 = vst.msk [vmem:[%s526 + $0x70] sm:$0xff] %vm975, %v2403
      %2436 = vst.msk [vmem:[%s526 + $0x78] sm:$0xff] %vm975, %v2404
      %2437 = vst.msk [vmem:[%s526 + $0x80] sm:$0xff] %vm975, %v2405
      %2438 = vst.msk [vmem:[%s526 + $0x88] sm:$0xff] %vm975, %v2406
      %2439 = vst.msk [vmem:[%s526 + $0x90] sm:$0xff] %vm975, %v2407
      %2440 = vst.msk [vmem:[%s526 + $0x98] sm:$0xff] %vm975, %v2408
      %2441 = vst.msk [vmem:[%s526 + $0xa0] sm:$0xff] %vm975, %v2409
      %2442 = vst.msk [vmem:[%s526 + $0xa8] sm:$0xff] %vm975, %v2410
      %2443 = vst.msk [vmem:[%s526 + $0xb0] sm:$0xff] %vm975, %v2411
      %2444 = vst.msk [vmem:[%s526 + $0xb8] sm:$0xff] %vm975, %v2412
      %2445 = vst.msk [vmem:[%s526 + $0xc0] sm:$0xff] %vm975, %v2413
      %2446 = vst.msk [vmem:[%s526 + $0xc8] sm:$0xff] %vm975, %v2414
      %2447 = vst.msk [vmem:[%s526 + $0xd0] sm:$0xff] %vm975, %v2415
      %2448 = vst.msk [vmem:[%s526 + $0xd8] sm:$0xff] %vm975, %v2416
      %2449 = vst.msk [vmem:[%s526 + $0xe0] sm:$0xff] %vm975, %v2417
      %2450 = vst.msk [vmem:[%s526 + $0xe8] sm:$0xff] %vm975, %v2418
      %2451 = vst.msk [vmem:[%s526 + $0xf0] sm:$0xff] %vm975, %v2419
      %2452 = vst.msk [vmem:[%s526 + $0xf8] sm:$0xff] %vm975, %v2420
      %v2453 = vld [vmem:[%s12] sm:$0xff]
      %v2454 = vld [vmem:[%s12 + $0x8] sm:$0xff]
      %v2455 = vld [vmem:[%s12 + $0x10] sm:$0xff]
      %v2456 = vld [vmem:[%s12 + $0x18] sm:$0xff]
      %v2457 = vld [vmem:[%s13] sm:$0x1]
      %v2459 = vlaneseq
      %v2460 = vshrl.u32 %v2459, 7
      %v2461 = vsub.s32 0, %v2460
      %v2462 = vrot.slane %v2457, %v2461
      %v2465 = vsel %vm975, %v2389, 0
      %v2468 = vsel %vm975, %v2390, 0
      %v2471 = vsel %vm975, %v2391, 0
      %v2474 = vsel %vm975, %v2392, 0
      %v2477 = vsel %vm975, %v2393, 0
      %v2480 = vsel %vm975, %v2394, 0
      %v2483 = vsel %vm975, %v2395, 0
      %v2486 = vsel %vm975, %v2396, 0
      %v2489 = vsel %vm975, %v2397, 0
      %v2492 = vsel %vm975, %v2398, 0
      %v2495 = vsel %vm975, %v2399, 0
      %v2498 = vsel %vm975, %v2400, 0
      %v2501 = vsel %vm975, %v2401, 0
      %v2504 = vsel %vm975, %v2402, 0
      %v2507 = vsel %vm975, %v2403, 0
      %v2510 = vsel %vm975, %v2404, 0
      %v2513 = vsel %vm975, %v2405, 0
      %v2516 = vsel %vm975, %v2406, 0
      %v2519 = vsel %vm975, %v2407, 0
      %v2522 = vsel %vm975, %v2408, 0
      %v2525 = vsel %vm975, %v2409, 0
      %v2528 = vsel %vm975, %v2410, 0
      %v2531 = vsel %vm975, %v2411, 0
      %v2534 = vsel %vm975, %v2412, 0
      %v2537 = vsel %vm975, %v2413, 0
      %v2540 = vsel %vm975, %v2414, 0
      %v2543 = vsel %vm975, %v2415, 0
      %v2546 = vsel %vm975, %v2416, 0
      %v2549 = vsel %vm975, %v2417, 0
      %v2552 = vsel %vm975, %v2418, 0
      %v2555 = vsel %vm975, %v2419, 0
      %v2558 = vsel %vm975, %v2420, 0
      %2560 = vmatprep.subr.mxu0 0.0
      %2561 = vmatpush1.msra.mxu0 %v2453
      %2562 = vmatprep.subr.mxu0 0.0
      %2563 = vmatpush1.msra.mxu0 %v2454
      %2564 = vmatprep.subr.mxu0 0.0
      %2565 = vmatpush1.msra.mxu0 %v2455
      %2566 = vmatprep.subr.mxu0 0.0
      %2567 = vmatpush1.msra.mxu0 %v2456
      %2568 = vmatprep.subr.mxu0 0.0
      %2569 = vmatpush1.msra.mxu0 0.0
      %2570 = vmatprep.subr.mxu0 0.0
      %2571 = vmatpush1.msra.mxu0 0.0
      %2572 = vmatprep.subr.mxu0 0.0
      %2573 = vmatpush1.msra.mxu0 0.0
      %2574 = vmatprep.subr.mxu0 0.0
      %2575 = vmatpush1.msra.mxu0 0.0
      %2576 = vmatprep.subr.mxu0 0.0
      %2577 = vmatpush1.msra.mxu0 0.0
      %2578 = vmatprep.subr.mxu0 0.0
      %2579 = vmatpush1.msra.mxu0 0.0
      %2580 = vmatprep.subr.mxu0 0.0
      %2581 = vmatpush1.msra.mxu0 0.0
      %2582 = vmatprep.subr.mxu0 0.0
      %2583 = vmatpush1.msra.mxu0 0.0
      %2584 = vmatprep.subr.mxu0 0.0
      %2585 = vmatpush1.msra.mxu0 0.0
      %2586 = vmatprep.subr.mxu0 0.0
      %2587 = vmatpush1.msra.mxu0 0.0
      %2588 = vmatprep.subr.mxu0 0.0
      %2589 = vmatpush1.msra.mxu0 0.0
      %2590 = vmatprep.subr.mxu0 0.0
      %2591 = vmatpush1.msra.mxu0 0.0
      %2592 = vmatprep.subr.mxu0 0.0
      %2593 = vmatpush1.msra.mxu0 0.0
      %2594 = vmatprep.subr.mxu0 0.0
      %2595 = vmatpush1.msra.mxu0 0.0
      %2596 = vmatprep.subr.mxu0 0.0
      %2597 = vmatpush1.msra.mxu0 0.0
      %2598 = vmatprep.subr.mxu0 0.0
      %2599 = vmatpush1.msra.mxu0 0.0
      %2600 = vmatprep.subr.mxu0 0.0
      %2601 = vmatpush1.msra.mxu0 0.0
      %2602 = vmatprep.subr.mxu0 0.0
      %2603 = vmatpush1.msra.mxu0 0.0
      %2604 = vmatprep.subr.mxu0 0.0
      %2605 = vmatpush1.msra.mxu0 0.0
      %2606 = vmatprep.subr.mxu0 0.0
      %2607 = vmatpush1.msra.mxu0 0.0
      %2608 = vmatprep.subr.mxu0 0.0
      %2609 = vmatpush1.msra.mxu0 0.0
      %2610 = vmatprep.subr.mxu0 0.0
      %2611 = vmatpush1.msra.mxu0 0.0
      %2612 = vmatprep.subr.mxu0 0.0
      %2613 = vmatpush1.msra.mxu0 0.0
      %2614 = vmatprep.subr.mxu0 0.0
      %2615 = vmatpush1.msra.mxu0 0.0
      %2616 = vmatprep.subr.mxu0 0.0
      %2617 = vmatpush1.msra.mxu0 0.0
      %2618 = vmatprep.subr.mxu0 0.0
      %2619 = vmatpush1.msra.mxu0 0.0
      %2620 = vmatprep.subr.mxu0 0.0
      %2621 = vmatpush1.msra.mxu0 0.0
      %2622 = vmatprep.subr.mxu0 0.0
      %2623 = vmatpush1.msra.mxu0 0.0
      %2624 = vmatprep.mubr.f32.mxu0 0.0
      %2625 = vmatmul.mubr.f32.gmra.mrb[0].mxu0 %v2465
      %v2626 = vpop.f32.mrb[0].mxu0
      %v2627 = vadd.f32 %v2462, %v2626
      %v2628 = vpop.f32.mrb[0].mxu0
      %2629 = vmatprep.mubr.f32.mxu0 0.0
      %2630 = vmatmul.mubr.f32.gmra.mrb[0].mxu0 %v2468
      %v2631 = vpop.f32.mrb[0].mxu0
      %v2632 = vadd.f32 %v2462, %v2631
      %v2633 = vpop.f32.mrb[0].mxu0
      %2634 = vmatprep.mubr.f32.mxu0 0.0
      %2635 = vmatmul.mubr.f32.gmra.mrb[0].mxu0 %v2471
      %v2636 = vpop.f32.mrb[0].mxu0
      %v2637 = vadd.f32 %v2462, %v2636
      %v2638 = vpop.f32.mrb[0].mxu0
      %2639 = vmatprep.mubr.f32.mxu0 0.0
      %2640 = vmatmul.mubr.f32.gmra.mrb[0].mxu0 %v2474
      %v2641 = vpop.f32.mrb[0].mxu0
      %v2642 = vadd.f32 %v2462, %v2641
      %v2643 = vpop.f32.mrb[0].mxu0
      %2644 = vmatprep.mubr.f32.mxu0 0.0
      %2645 = vmatmul.mubr.f32.gmra.mrb[0].mxu0 %v2477
      %v2646 = vpop.f32.mrb[0].mxu0
      %v2647 = vadd.f32 %v2462, %v2646
      %v2648 = vpop.f32.mrb[0].mxu0
      %2649 = vmatprep.mubr.f32.mxu0 0.0
      %2650 = vmatmul.mubr.f32.gmra.mrb[0].mxu0 %v2480
      %v2651 = vpop.f32.mrb[0].mxu0
      %v2652 = vadd.f32 %v2462, %v2651
      %v2653 = vpop.f32.mrb[0].mxu0
      %2654 = vmatprep.mubr.f32.mxu0 0.0
      %2655 = vmatmul.mubr.f32.gmra.mrb[0].mxu0 %v2483
      %v2656 = vpop.f32.mrb[0].mxu0
      %v2657 = vadd.f32 %v2462, %v2656
      %v2658 = vpop.f32.mrb[0].mxu0
      %2659 = vmatprep.mubr.f32.mxu0 0.0
      %2660 = vmatmul.mubr.f32.gmra.mrb[0].mxu0 %v2486
      %v2661 = vpop.f32.mrb[0].mxu0
      %v2662 = vadd.f32 %v2462, %v2661
      %v2663 = vpop.f32.mrb[0].mxu0
      %2664 = vmatprep.mubr.f32.mxu0 0.0
      %2665 = vmatmul.mubr.f32.gmra.mrb[0].mxu0 %v2489
      %v2666 = vpop.f32.mrb[0].mxu0
      %v2667 = vadd.f32 %v2462, %v2666
      %v2668 = vpop.f32.mrb[0].mxu0
      %2669 = vmatprep.mubr.f32.mxu0 0.0
      %2670 = vmatmul.mubr.f32.gmra.mrb[0].mxu0 %v2492
      %v2671 = vpop.f32.mrb[0].mxu0
      %v2672 = vadd.f32 %v2462, %v2671
      %v2673 = vpop.f32.mrb[0].mxu0
      %2674 = vmatprep.mubr.f32.mxu0 0.0
      %2675 = vmatmul.mubr.f32.gmra.mrb[0].mxu0 %v2495
      %v2676 = vpop.f32.mrb[0].mxu0
      %v2677 = vadd.f32 %v2462, %v2676
      %v2678 = vpop.f32.mrb[0].mxu0
      %2679 = vmatprep.mubr.f32.mxu0 0.0
      %2680 = vmatmul.mubr.f32.gmra.mrb[0].mxu0 %v2498
      %v2681 = vpop.f32.mrb[0].mxu0
      %v2682 = vadd.f32 %v2462, %v2681
      %v2683 = vpop.f32.mrb[0].mxu0
      %2684 = vmatprep.mubr.f32.mxu0 0.0
      %2685 = vmatmul.mubr.f32.gmra.mrb[0].mxu0 %v2501
      %v2686 = vpop.f32.mrb[0].mxu0
      %v2687 = vadd.f32 %v2462, %v2686
      %v2688 = vpop.f32.mrb[0].mxu0
      %2689 = vmatprep.mubr.f32.mxu0 0.0
      %2690 = vmatmul.mubr.f32.gmra.mrb[0].mxu0 %v2504
      %v2691 = vpop.f32.mrb[0].mxu0
      %v2692 = vadd.f32 %v2462, %v2691
      %v2693 = vpop.f32.mrb[0].mxu0
      %2694 = vmatprep.mubr.f32.mxu0 0.0
      %2695 = vmatmul.mubr.f32.gmra.mrb[0].mxu0 %v2507
      %v2696 = vpop.f32.mrb[0].mxu0
      %v2697 = vadd.f32 %v2462, %v2696
      %v2698 = vpop.f32.mrb[0].mxu0
      %2699 = vmatprep.mubr.f32.mxu0 0.0
      %2700 = vmatmul.mubr.f32.gmra.mrb[0].mxu0 %v2510
      %v2701 = vpop.f32.mrb[0].mxu0
      %v2702 = vadd.f32 %v2462, %v2701
      %v2703 = vpop.f32.mrb[0].mxu0
      %2704 = vmatprep.mubr.f32.mxu0 0.0
      %2705 = vmatmul.mubr.f32.gmra.mrb[0].mxu0 %v2513
      %v2706 = vpop.f32.mrb[0].mxu0
      %v2707 = vadd.f32 %v2462, %v2706
      %v2708 = vpop.f32.mrb[0].mxu0
      %2709 = vmatprep.mubr.f32.mxu0 0.0
      %2710 = vmatmul.mubr.f32.gmra.mrb[0].mxu0 %v2516
      %v2711 = vpop.f32.mrb[0].mxu0
      %v2712 = vadd.f32 %v2462, %v2711
      %v2713 = vpop.f32.mrb[0].mxu0
      %2714 = vmatprep.mubr.f32.mxu0 0.0
      %2715 = vmatmul.mubr.f32.gmra.mrb[0].mxu0 %v2519
      %v2716 = vpop.f32.mrb[0].mxu0
      %v2717 = vadd.f32 %v2462, %v2716
      %v2718 = vpop.f32.mrb[0].mxu0
      %2719 = vmatprep.mubr.f32.mxu0 0.0
      %2720 = vmatmul.mubr.f32.gmra.mrb[0].mxu0 %v2522
      %v2721 = vpop.f32.mrb[0].mxu0
      %v2722 = vadd.f32 %v2462, %v2721
      %v2723 = vpop.f32.mrb[0].mxu0
      %2724 = vmatprep.mubr.f32.mxu0 0.0
      %2725 = vmatmul.mubr.f32.gmra.mrb[0].mxu0 %v2525
      %v2726 = vpop.f32.mrb[0].mxu0
      %v2727 = vadd.f32 %v2462, %v2726
      %v2728 = vpop.f32.mrb[0].mxu0
      %2729 = vmatprep.mubr.f32.mxu0 0.0
      %2730 = vmatmul.mubr.f32.gmra.mrb[0].mxu0 %v2528
      %v2731 = vpop.f32.mrb[0].mxu0
      %v2732 = vadd.f32 %v2462, %v2731
      %v2733 = vpop.f32.mrb[0].mxu0
      %2734 = vmatprep.mubr.f32.mxu0 0.0
      %2735 = vmatmul.mubr.f32.gmra.mrb[0].mxu0 %v2531
      %v2736 = vpop.f32.mrb[0].mxu0
      %v2737 = vadd.f32 %v2462, %v2736
      %v2738 = vpop.f32.mrb[0].mxu0
      %2739 = vmatprep.mubr.f32.mxu0 0.0
      %2740 = vmatmul.mubr.f32.gmra.mrb[0].mxu0 %v2534
      %v2741 = vpop.f32.mrb[0].mxu0
      %v2742 = vadd.f32 %v2462, %v2741
      %v2743 = vpop.f32.mrb[0].mxu0
      %2744 = vmatprep.mubr.f32.mxu0 0.0
      %2745 = vmatmul.mubr.f32.gmra.mrb[0].mxu0 %v2537
      %v2746 = vpop.f32.mrb[0].mxu0
      %v2747 = vadd.f32 %v2462, %v2746
      %v2748 = vpop.f32.mrb[0].mxu0
      %2749 = vmatprep.mubr.f32.mxu0 0.0
      %2750 = vmatmul.mubr.f32.gmra.mrb[0].mxu0 %v2540
      %v2751 = vpop.f32.mrb[0].mxu0
      %v2752 = vadd.f32 %v2462, %v2751
      %v2753 = vpop.f32.mrb[0].mxu0
      %2754 = vmatprep.mubr.f32.mxu0 0.0
      %2755 = vmatmul.mubr.f32.gmra.mrb[0].mxu0 %v2543
      %v2756 = vpop.f32.mrb[0].mxu0
      %v2757 = vadd.f32 %v2462, %v2756
      %v2758 = vpop.f32.mrb[0].mxu0
      %2759 = vmatprep.mubr.f32.mxu0 0.0
      %2760 = vmatmul.mubr.f32.gmra.mrb[0].mxu0 %v2546
      %v2761 = vpop.f32.mrb[0].mxu0
      %v2762 = vadd.f32 %v2462, %v2761
      %v2763 = vpop.f32.mrb[0].mxu0
      %2764 = vmatprep.mubr.f32.mxu0 0.0
      %2765 = vmatmul.mubr.f32.gmra.mrb[0].mxu0 %v2549
      %v2766 = vpop.f32.mrb[0].mxu0
      %v2767 = vadd.f32 %v2462, %v2766
      %v2768 = vpop.f32.mrb[0].mxu0
      %2769 = vmatprep.mubr.f32.mxu0 0.0
      %2770 = vmatmul.mubr.f32.gmra.mrb[0].mxu0 %v2552
      %v2771 = vpop.f32.mrb[0].mxu0
      %v2772 = vadd.f32 %v2462, %v2771
      %v2773 = vpop.f32.mrb[0].mxu0
      %2774 = vmatprep.mubr.f32.mxu0 0.0
      %2775 = vmatmul.mubr.f32.gmra.mrb[0].mxu0 %v2555
      %v2776 = vpop.f32.mrb[0].mxu0
      %v2777 = vadd.f32 %v2462, %v2776
      %v2778 = vpop.f32.mrb[0].mxu0
      %2779 = vmatprep.mubr.f32.mxu0 0.0
      %2780 = vmatmul.mubr.f32.gmra.mrb[0].mxu0 %v2558
      %v2781 = vpop.f32.mrb[0].mxu0
      %v2782 = vadd.f32 %v2462, %v2781
      %v2783 = vpop.f32.mrb[0].mxu0
      %2784 = vdwg.mxu0
      %vm2785 = vcmask 64512
      %2786 = vst.msk [vmem:[%s532] sm:$0xff] %vm2785, %v2627
      %2787 = vst.msk [vmem:[%s532 + $0x8] sm:$0xff] %vm2785, %v2632
      %2788 = vst.msk [vmem:[%s532 + $0x10] sm:$0xff] %vm2785, %v2637
      %2789 = vst.msk [vmem:[%s532 + $0x18] sm:$0xff] %vm2785, %v2642
      %2790 = vst.msk [vmem:[%s532 + $0x20] sm:$0xff] %vm2785, %v2647
      %2791 = vst.msk [vmem:[%s532 + $0x28] sm:$0xff] %vm2785, %v2652
      %2792 = vst.msk [vmem:[%s532 + $0x30] sm:$0xff] %vm2785, %v2657
      %2793 = vst.msk [vmem:[%s532 + $0x38] sm:$0xff] %vm2785, %v2662
      %2794 = vst.msk [vmem:[%s532 + $0x40] sm:$0xff] %vm2785, %v2667
      %2795 = vst.msk [vmem:[%s532 + $0x48] sm:$0xff] %vm2785, %v2672
      %2796 = vst.msk [vmem:[%s532 + $0x50] sm:$0xff] %vm2785, %v2677
      %2797 = vst.msk [vmem:[%s532 + $0x58] sm:$0xff] %vm2785, %v2682
      %2798 = vst.msk [vmem:[%s532 + $0x60] sm:$0xff] %vm2785, %v2687
      %2799 = vst.msk [vmem:[%s532 + $0x68] sm:$0xff] %vm2785, %v2692
      %2800 = vst.msk [vmem:[%s532 + $0x70] sm:$0xff] %vm2785, %v2697
      %2801 = vst.msk [vmem:[%s532 + $0x78] sm:$0xff] %vm2785, %v2702
      %2802 = vst.msk [vmem:[%s532 + $0x80] sm:$0xff] %vm2785, %v2707
      %2803 = vst.msk [vmem:[%s532 + $0x88] sm:$0xff] %vm2785, %v2712
      %2804 = vst.msk [vmem:[%s532 + $0x90] sm:$0xff] %vm2785, %v2717
      %2805 = vst.msk [vmem:[%s532 + $0x98] sm:$0xff] %vm2785, %v2722
      %2806 = vst.msk [vmem:[%s532 + $0xa0] sm:$0xff] %vm2785, %v2727
      %2807 = vst.msk [vmem:[%s532 + $0xa8] sm:$0xff] %vm2785, %v2732
      %2808 = vst.msk [vmem:[%s532 + $0xb0] sm:$0xff] %vm2785, %v2737
      %2809 = vst.msk [vmem:[%s532 + $0xb8] sm:$0xff] %vm2785, %v2742
      %2810 = vst.msk [vmem:[%s532 + $0xc0] sm:$0xff] %vm2785, %v2747
      %2811 = vst.msk [vmem:[%s532 + $0xc8] sm:$0xff] %vm2785, %v2752
      %2812 = vst.msk [vmem:[%s532 + $0xd0] sm:$0xff] %vm2785, %v2757
      %2813 = vst.msk [vmem:[%s532 + $0xd8] sm:$0xff] %vm2785, %v2762
      %2814 = vst.msk [vmem:[%s532 + $0xe0] sm:$0xff] %vm2785, %v2767
      %2815 = vst.msk [vmem:[%s532 + $0xe8] sm:$0xff] %vm2785, %v2772
      %2816 = vst.msk [vmem:[%s532 + $0xf0] sm:$0xff] %vm2785, %v2777
      %2817 = vst.msk [vmem:[%s532 + $0xf8] sm:$0xff] %vm2785, %v2782
      %s2818 = smul.u32 32, %s27
      %p2819 = scmp.lt.s32.totalorder %s2818, 63
      %s2820 = scalar_select %p2819, %s2818, 63
      %s2821 = smul.addr %s2820, 8
      %s2822 = scalar_lea.vmem %s14, %s2821
      %s2823 = smul.u32 32, %s27
      %p2824 = scmp.lt.s32.totalorder %s2823, 63
      %s2825 = scalar_select %p2824, %s2823, 63
      %s2826 = smul.addr %s2825, 8
      %s2827 = scalar_lea.vmem %s15, %s2826
      // Predicated region
      $region77: #{tpu_custom_call.1} parent=75 // pred_check
        %p2828 = pneg %p349
      $region78: #{tpu_custom_call.1} parent=75 // pred_check_branch
        %2830 = sbr.rel (%p2828) target = $region80
      $region79: #{tpu_custom_call.1} parent=75 // pred_region
        %s2831 = smul.u32 32, %s27
      $region80: #{tpu_custom_call.1} parent=75 // pred_fallthru
        _
      // Predicated region
      $region81: #{tpu_custom_call.1} parent=75 // pred_check
        %p2832 = pneg %p375
      $region82: #{tpu_custom_call.1} parent=75 // pred_check_branch
        %2834 = sbr.rel (%p2832) target = $region84
      $region83: #{tpu_custom_call.1} parent=75 // pred_region
        %s2835 = smul.u32 32, %s27
      $region84: #{tpu_custom_call.1} parent=75 // pred_fallthru
        _
    $region76: #{tpu_custom_call.1} parent=5 // pred_fallthru
      _
    %p2836 = scmp.le.s32.totalorder 2, %s22
    // Predicated region
    $region85: #{tpu_custom_call.1} parent=5 // pred_check
      %p2837 = pneg %p2836
    $region86: #{tpu_custom_call.1} parent=5 // pred_check_branch
      %2839 = sbr.rel (%p2837) target = $region88
    $region87: #{tpu_custom_call.1} parent=5 // pred_region
      %s2840 = ssub.s32 %s22, 2
      // Predicated region
      $region89: #{tpu_custom_call.1} parent=87 // pred_check
        %p2841 = pneg %p355
      $region90: #{tpu_custom_call.1} parent=87 // pred_check_branch
        %2843 = sbr.rel (%p2841) target = $region92
      $region91: #{tpu_custom_call.1} parent=87 // pred_region
        %s2844 = smul.u32 32, %s28
        %p2845 = scmp.lt.s32.totalorder %s2844, 63
        %s2846 = scalar_select %p2845, %s2844, 63
        %s2847 = smul.addr %s2846, 8
        %s2848 = scalar_lea.vmem %s14, %s2847
      $region92: #{tpu_custom_call.1} parent=87 // pred_fallthru
        _
      // Predicated region
      $region93: #{tpu_custom_call.1} parent=87 // pred_check
        %p2849 = pneg %p381
      $region94: #{tpu_custom_call.1} parent=87 // pred_check_branch
        %2851 = sbr.rel (%p2849) target = $region96
      $region95: #{tpu_custom_call.1} parent=87 // pred_region
        %s2852 = smul.u32 32, %s28
        %p2853 = scmp.lt.s32.totalorder %s2852, 63
        %s2854 = scalar_select %p2853, %s2852, 63
        %s2855 = smul.addr %s2854, 8
        %s2856 = scalar_lea.vmem %s15, %s2855
      $region96: #{tpu_custom_call.1} parent=87 // pred_fallthru
        _
    $region88: #{tpu_custom_call.1} parent=5 // pred_fallthru
      _
  $region6: #{tpu_custom_call.1} parent=0 // loop_footer
    %s26 = sadd.s32 1, %s22
  $region7: #{tpu_custom_call.1} parent=0 // loop_footer_branch
    %21 = sbr.rel target = $region3
  $region8: #{tpu_custom_call.1} parent=0 // loop_exit
    _

</llo_original>
